<compile_context>
chip_gen: v7x
topology: tpu7x:2x2x1
jax: 0.10.0
libtpu: 0.0.40
codegen_flags: <defaults>
</compile_context>

<pallas_src>
import functools

import jax
import jax.numpy as jnp
import numpy as np
from jax.experimental import pallas as pl
from jax.experimental.pallas import tpu as pltpu


def _softmax_over_seq(s):
    """Softmax over axis=1 of [Bt, S, heads]; divide on the EUP (approx recip)."""
    m = jnp.max(s, axis=1, keepdims=True)
    e = jnp.exp(s - m)
    return e * pl.reciprocal(jnp.sum(e, axis=1, keepdims=True), approx=True)


def _fast_self_attention_kernel(
    x_ref, mask_ref, e_ref,
    wqk_ref, bqk_ref,
    wka_ref, bka_ref,
    wt_ref, bt_ref,
    o_ref,
    *, head_dim: int, num_heads: int,
):
    Bt, S, H = x_ref.shape
    inv_sqrt_d = 1.0 / (float(head_dim) ** 0.5)

    x = x_ref[...]                                    # [Bt, S, H] bf16
    mask = mask_ref[...]                              # [Bt, S, 1] additive f32
    E = e_ref[...]                                    # [heads, H] bf16 (0/1)

    rows = Bt * S
    x2 = x.reshape(rows, H)

    # Fused Q | K | query-attention projection: one MXU pass over x
    # (bf16 in, f32 accumulate). Columns [2H:] are x @ (wq @ wqa) + fused bias.
    qk = jnp.dot(x2, wqk_ref[...],
                 preferred_element_type=jnp.float32) + bqk_ref[...]   # [rows, 2H+heads]
    q2 = qk[:, :H]
    k2 = qk[:, H:2 * H]
    qs = qk[:, 2 * H:] * inv_sqrt_d                                   # [rows, heads]
    q3 = q2.reshape(Bt, S, H)
    k3 = k2.reshape(Bt, S, H)

    # --- query attention pooling ---
    qw = _softmax_over_seq(qs.reshape(Bt, S, num_heads) + mask)       # [Bt,S,heads]
    # Expand per-head weights to hidden columns with a bf16 [heads,H] matmul,
    # then pool with a VPU multiply + sublane reduce (no transpose).
    qw_exp = jnp.dot(qw.reshape(rows, num_heads).astype(jnp.bfloat16), E,
                     preferred_element_type=jnp.float32).reshape(Bt, S, H)
    pooled_q = jnp.sum(qw_exp * q3, axis=1, keepdims=True)            # [Bt,1,H]

    mixed = k3 * pooled_q                                             # [Bt,S,H]

    # --- key attention pooling ---
    ks = (jnp.dot(mixed.reshape(rows, H).astype(jnp.bfloat16), wka_ref[...],
                  preferred_element_type=jnp.float32) + bka_ref[...]) * inv_sqrt_d
    kw = _softmax_over_seq(ks.reshape(Bt, S, num_heads) + mask)
    kw_exp = jnp.dot(kw.reshape(rows, num_heads).astype(jnp.bfloat16), E,
                     preferred_element_type=jnp.float32).reshape(Bt, S, H)
    pooled_k = jnp.sum(kw_exp * mixed, axis=1, keepdims=True)         # [Bt,1,H]

    # --- output transform + residual with q (kept f32) ---
    wv = pooled_k * q3                                                # [Bt,S,H]
    wv = jnp.dot(wv.reshape(rows, H).astype(jnp.bfloat16), wt_ref[...],
                 preferred_element_type=jnp.float32) + bt_ref[...]
    o_ref[...] = wv.reshape(Bt, S, H) + q3


def _vmem_budget_bytes():
    """~75% of physical VMEM: 96 MiB on v5e/v6e (128 MiB), 48 MiB on v7x (64 MiB)."""
    cap = 64 * 1024 * 1024
    try:
        cap = int(pltpu.get_tpu_info().vmem_capacity_bytes)
    except Exception:
        pass
    return min((cap * 3) // 4, 96 * 1024 * 1024)


def _pick_block_b(B, S, H, heads, vmem_budget_bytes, target_rows=512):
    """Size block_b from the live set (~12 rows x H f32 temporaries + weights),
    prefer rows = block_b*S a multiple of 256 (then 128) for MXU M granularity,
    and keep >=2 grid steps when B allows (megacore / v7x two TensorCores)."""
    weight_bytes = (H * (2 * H + heads) * 2      # fused wqk (bf16)
                    + H * heads * 2              # wka (bf16)
                    + H * H * 2                  # wt  (bf16)
                    + heads * H * 2              # E   (bf16)
                    + (3 * H + 2 * heads) * 4)   # biases (f32)
    per_row_bytes = 12 * H * 4
    avail = max(per_row_bytes, int(0.8 * vmem_budget_bytes) - 2 * weight_bytes)
    rows_cap = max(S, min(target_rows, avail // per_row_bytes))

    divisors = [d for d in range(1, B + 1) if B % d == 0 and d * S <= rows_cap] or [1]

    def best(mult):
        cands = [d for d in divisors if (d * S) % mult == 0]
        return max(cands) if cands else None

    bt = best(256) or best(128) or max(divisors)
    if B >= 2 and B // bt < 2:
        smaller = [d for d in divisors if d <= bt // 2] or [1]
        bt = max(smaller)
    return bt


def fast_self_attention(x, mask, params, *, num_heads, block_b=None,
                        single_buffer_weights=True):
    """x: [B, S, H] float; mask: [B, S] additive float mask (broadcast over heads)."""
    B, S, H = x.shape
    heads = num_heads
    head_dim = H // heads
    f32, bf16 = jnp.float32, jnp.bfloat16

    vmem_budget = _vmem_budget_bytes()
    if block_b is None:
        block_b = _pick_block_b(B, S, H, heads, vmem_budget)
    assert B % block_b == 0

    # head-expansion matrix: E[h, m] = 1 iff hidden column m belongs to head h
    # (0/1 values are exact in bf16).
    col = np.arange(H) // head_dim
    E = jnp.asarray((col[None, :] == np.arange(heads)[:, None]).astype(np.float32)).astype(bf16)

    # mask as [B, S, 1]; broadcast over heads happens in-kernel (no HBM blowup).
    mask3 = mask.astype(f32)[:, :, None]

    # Fuse Q | K | (query @ query_att): compose wq@wqa in f32, then bf16.
    wq, wk = params["wq"].astype(f32), params["wk"].astype(f32)
    wqa, bqa = params["wqa"].astype(f32), params["bqa"].astype(f32)
    bq, bk = params["bq"].astype(f32), params["bk"].astype(f32)
    wqa_eff = wq @ wqa                                     # [H, heads]
    bqa_eff = bq @ wqa + bqa                               # [1, heads]
    wqk = jnp.concatenate([wq, wk, wqa_eff], axis=1).astype(bf16)   # [H, 2H+heads]
    bqk = jnp.concatenate([bq, bk, bqa_eff], axis=1)                # [1, 2H+heads] f32
    wka = params["wka"].astype(bf16)
    bka = params["bka"].astype(f32)
    wt = params["wt"].astype(bf16)
    bt = params["bt"].astype(f32)

    # x only ever feeds bf16 matmuls: cast at the boundary (halves x DMA bytes).
    x_bf16 = x.astype(bf16)

    kernel = functools.partial(_fast_self_attention_kernel,
                               head_dim=head_dim, num_heads=heads)

    def build(weights_single_buffered):
        def w_spec(shape):
            idx = lambda b: (0,) * len(shape)
            if weights_single_buffered:
                try:
                    # grid-invariant blocks: single-buffer to save VMEM (v7x).
                    return pl.BlockSpec(shape, idx, pipeline_mode=pl.Buffered(1))
                except Exception:
                    pass
            return pl.BlockSpec(shape, idx)

        in_specs = [
            pl.BlockSpec((block_b, S, H), lambda b: (b, 0, 0)),       # x (bf16)
            pl.BlockSpec((block_b, S, 1), lambda b: (b, 0, 0)),       # mask
            w_spec((heads, H)),                                       # E
            w_spec((H, 2 * H + heads)), w_spec((1, 2 * H + heads)),   # wqk, bqk
            w_spec((H, heads)), w_spec((1, heads)),                   # wka, bka
            w_spec((H, H)), w_spec((1, H)),                           # wt, bt
        ]

        # advisory cost estimate so XLA schedules neighbouring ops around us
        flops = (2 * B * S * H * (2 * H + heads)     # fused projection
                 + 2 * B * S * H * heads             # key_att
                 + 2 * 2 * B * S * heads * H         # two head expansions
                 + 2 * B * S * H * H)                # transform
        bytes_accessed = (x_bf16.size * 2 + B * S * H * 4 + mask3.size * 4
                          + (wqk.size + wka.size + wt.size + E.size) * 2
                          + (bqk.size + bka.size + bt.size) * 4)
        cost = pl.CostEstimate(flops=int(flops),
                               transcendentals=int(2 * B * S * heads),
                               bytes_accessed=int(bytes_accessed))

        return pl.pallas_call(
            kernel,
            out_shape=jax.ShapeDtypeStruct((B, S, H), f32),
            grid_spec=pltpu.PrefetchScalarGridSpec(
                num_scalar_prefetch=0,
                grid=(B // block_b,),
                in_specs=in_specs,
                out_specs=pl.BlockSpec((block_b, S, H), lambda b: (b, 0, 0)),
            ),
            compiler_params=pltpu.CompilerParams(
                dimension_semantics=("parallel",),
                vmem_limit_bytes=vmem_budget),
            cost_estimate=cost,
        )

    args = (x_bf16, mask3, E, wqk, bqk, wka, bka, wt, bt)
    try:
        return build(single_buffer_weights)(*args)
    except Exception:
        if not single_buffer_weights:
            raise
        # Fallback: default double-buffered weight blocks if this JAX/Mosaic
        # build rejects pipeline_mode=Buffered(1). A genuine kernel bug would
        # re-raise here as well.
        return build(False)(*args)


def ref_fast_self_attention(x, mask, params, *, num_heads):
    """Pure-JAX f32 reference mirroring the PyTorch FastSelfAttention.forward."""
    B, S, H = x.shape
    d = H // num_heads
    inv = 1.0 / (d ** 0.5)

    q = x @ params["wq"] + params["bq"]                       # [B,S,H]
    k = x @ params["wk"] + params["bk"]

    qs = (q @ params["wqa"] + params["bqa"]) * inv            # [B,S,heads]
    qs = jnp.swapaxes(qs, 1, 2) + mask[:, None, :]            # [B,heads,S]
    qw = jax.nn.softmax(qs, axis=-1)[:, :, None, :]           # [B,heads,1,S]
    q4 = jnp.swapaxes(q.reshape(B, S, num_heads, d), 1, 2)    # [B,heads,S,d]
    pooled_q = jnp.matmul(qw, q4)                             # [B,heads,1,d]
    pooled_q = jnp.swapaxes(pooled_q, 1, 2).reshape(B, 1, H)  # [B,1,H]

    mixed = k * pooled_q
    ks = (mixed @ params["wka"] + params["bka"]) * inv
    ks = jnp.swapaxes(ks, 1, 2) + mask[:, None, :]
    kw = jax.nn.softmax(ks, axis=-1)[:, :, None, :]
    m4 = jnp.swapaxes(mixed.reshape(B, S, num_heads, d), 1, 2)
    pooled_k = jnp.matmul(kw, m4)                             # [B,heads,1,d]

    wv = pooled_k * q4                                        # [B,heads,S,d]
    wv = jnp.swapaxes(wv, 1, 2).reshape(B, S, H)
    return wv @ params["wt"] + params["bt"] + q


def make_params(key, hidden, num_heads, init_range=0.02):
    ks = jax.random.split(key, 5)
    f = jnp.float32

    def lin(k, fan_in, fan_out):
        # stored already transposed to [in, out]; bias zero (matches init_weights)
        return (init_range * jax.random.normal(k, (fan_in, fan_out), f),
                jnp.zeros((1, fan_out), f))

    wq, bq = lin(ks[0], hidden, hidden)
    wk, bk = lin(ks[1], hidden, hidden)
    wqa, bqa = lin(ks[2], hidden, num_heads)
    wka, bka = lin(ks[3], hidden, num_heads)
    wt, bt = lin(ks[4], hidden, hidden)
    return dict(wq=wq, bq=bq, wk=wk, bk=bk,
                wqa=wqa, bqa=bqa, wka=wka, bka=bka,
                wt=wt, bt=bt)


if __name__ == "__main__":
    # H is a multiple of 128 so the fused-projection slices are lane-tile
    # aligned and the output block is lane-dense; shapes stay small.
    B, S, H, HEADS = 4, 16, 128, 8

    key = jax.random.PRNGKey(0)
    kx, kp = jax.random.split(key)
    x = jax.random.normal(kx, (B, S, H), jnp.float32)

    # additive mask: mask out trailing positions of batches 1 and 3
    mask = np.zeros((B, S), np.float32)
    mask[1, -3:] = -10000.0
    mask[3, -5:] = -10000.0
    mask = jnp.asarray(mask)

    params = make_params(kp, H, HEADS)

    out = fast_self_attention(x, mask, params, num_heads=HEADS)
    out = jax.block_until_ready(out)

    ref = ref_fast_self_attention(x, mask, params, num_heads=HEADS)
    # tolerance accounts for bf16 matmul inputs / weights (f32 accumulation)
    # and the approx EUP reciprocal in the softmax
    np.testing.assert_allclose(np.asarray(out), np.asarray(ref),
                               rtol=2e-2, atol=2e-3)
    print("KERNEL_OK")
</pallas_src>

<mosaic_0001>
module attributes {stable_mosaic.version = 11 : i64} {
  func.func @_fast_self_attention_kernel(%arg0: i32, %arg1: memref<2x16x128xbf16, #tpu.memory_space<vmem>>, %arg2: memref<2x16x1xf32, #tpu.memory_space<vmem>>, %arg3: memref<8x128xbf16, #tpu.memory_space<vmem>>, %arg4: memref<128x264xbf16, #tpu.memory_space<vmem>>, %arg5: memref<1x264xf32, #tpu.memory_space<vmem>>, %arg6: memref<128x8xbf16, #tpu.memory_space<vmem>>, %arg7: memref<1x8xf32, #tpu.memory_space<vmem>>, %arg8: memref<128x128xbf16, #tpu.memory_space<vmem>>, %arg9: memref<1x128xf32, #tpu.memory_space<vmem>>, %arg10: memref<2x16x128xf32, #tpu.memory_space<vmem>>) attributes {dimension_semantics = [#tpu.dimension_semantics<parallel>], iteration_bounds = array<i64: 2>, scalar_prefetch = 0 : i64, scratch_operands = 0 : i64, tpu.core_type = #tpu.core_type<tc>, window_params = [{transform_indices = @transform_0, window_bounds = array<i64: 2, 16, 128>}, {transform_indices = @transform_1, window_bounds = array<i64: 2, 16, 1>}, {pipeline_mode = #tpu.pipeline_mode<synchronous>, transform_indices = @transform_2, window_bounds = array<i64: 8, 128>}, {pipeline_mode = #tpu.pipeline_mode<synchronous>, transform_indices = @transform_3, window_bounds = array<i64: 128, 264>}, {pipeline_mode = #tpu.pipeline_mode<synchronous>, transform_indices = @transform_4, window_bounds = array<i64: 1, 264>}, {pipeline_mode = #tpu.pipeline_mode<synchronous>, transform_indices = @transform_5, window_bounds = array<i64: 128, 8>}, {pipeline_mode = #tpu.pipeline_mode<synchronous>, transform_indices = @transform_6, window_bounds = array<i64: 1, 8>}, {pipeline_mode = #tpu.pipeline_mode<synchronous>, transform_indices = @transform_7, window_bounds = array<i64: 128, 128>}, {pipeline_mode = #tpu.pipeline_mode<synchronous>, transform_indices = @transform_8, window_bounds = array<i64: 1, 128>}, {transform_indices = @transform_9, window_bounds = array<i64: 2, 16, 128>}]} {
    %c0 = arith.constant 0 : index
    %c0_0 = arith.constant 0 : index
    %c0_1 = arith.constant 0 : index
    %0 = vector.load %arg1[%c0, %c0_0, %c0_1] : memref<2x16x128xbf16, #tpu.memory_space<vmem>>, vector<2x16x128xbf16>
    %c0_2 = arith.constant 0 : index
    %c0_3 = arith.constant 0 : index
    %c0_4 = arith.constant 0 : index
    %1 = vector.load %arg2[%c0_2, %c0_3, %c0_4] : memref<2x16x1xf32, #tpu.memory_space<vmem>>, vector<2x16x1xf32>
    %c0_5 = arith.constant 0 : index
    %c0_6 = arith.constant 0 : index
    %2 = vector.load %arg3[%c0_5, %c0_6] : memref<8x128xbf16, #tpu.memory_space<vmem>>, vector<8x128xbf16>
    %3 = vector.shape_cast %0 : vector<2x16x128xbf16> to vector<32x128xbf16>
    %c0_7 = arith.constant 0 : index
    %c0_8 = arith.constant 0 : index
    %4 = vector.load %arg4[%c0_7, %c0_8] : memref<128x264xbf16, #tpu.memory_space<vmem>>, vector<128x264xbf16>
    %cst = arith.constant dense<0.000000e+00> : vector<32x264xf32>
    %5 = tpu.matmul %3, %4, %cst {dimension_numbers = #tpu.dot_dimension_numbers<[1], [0], [0], [1], [0, 0, 1, 1], [], []>} : vector<32x128xbf16>, vector<128x264xbf16>, vector<32x264xf32> -> vector<32x264xf32>
    %c0_9 = arith.constant 0 : index
    %c0_10 = arith.constant 0 : index
    %6 = vector.load %arg5[%c0_9, %c0_10] : memref<1x264xf32, #tpu.memory_space<vmem>>, vector<1x264xf32>
    %7 = vector.broadcast %6 : vector<1x264xf32> to vector<32x264xf32>
    %8 = arith.addf %5, %7 : vector<32x264xf32>
    %9 = vector.extract_strided_slice %8 {offsets = [0, 0], sizes = [32, 128], strides = [1, 1]} : vector<32x264xf32> to vector<32x128xf32>
    %10 = vector.extract_strided_slice %8 {offsets = [0, 128], sizes = [32, 128], strides = [1, 1]} : vector<32x264xf32> to vector<32x128xf32>
    %11 = vector.extract_strided_slice %8 {offsets = [0, 256], sizes = [32, 8], strides = [1, 1]} : vector<32x264xf32> to vector<32x8xf32>
    %cst_11 = arith.constant 2.500000e-01 : f32
    %12 = vector.broadcast %cst_11 : f32 to vector<32x8xf32>
    %13 = arith.mulf %11, %12 : vector<32x8xf32>
    %14 = vector.shape_cast %9 : vector<32x128xf32> to vector<2x16x128xf32>
    %15 = vector.shape_cast %10 : vector<32x128xf32> to vector<2x16x128xf32>
    %16 = vector.shape_cast %13 : vector<32x8xf32> to vector<2x16x8xf32>
    %17 = vector.broadcast %1 : vector<2x16x1xf32> to vector<2x16x8xf32>
    %18 = arith.addf %16, %17 : vector<2x16x8xf32>
    %cst_12 = arith.constant dense<0xFF800000> : vector<2x8xf32>
    %19 = vector.multi_reduction <maximumf>, %18, %cst_12 [1] : vector<2x16x8xf32> to vector<2x8xf32>
    %20 = vector.shape_cast %19 : vector<2x8xf32> to vector<2x1x8xf32>
    %21 = vector.broadcast %20 : vector<2x1x8xf32> to vector<2x16x8xf32>
    %22 = arith.subf %18, %21 : vector<2x16x8xf32>
    %23 = math.exp %22 : vector<2x16x8xf32>
    %cst_13 = arith.constant dense<0.000000e+00> : vector<2x8xf32>
    %24 = vector.multi_reduction <add>, %23, %cst_13 [1] : vector<2x16x8xf32> to vector<2x8xf32>
    %25 = vector.shape_cast %24 : vector<2x8xf32> to vector<2x1x8xf32>
    %26 = tpu.reciprocal %25 {approx = true} : vector<2x1x8xf32> -> vector<2x1x8xf32>
    %27 = vector.broadcast %26 : vector<2x1x8xf32> to vector<2x16x8xf32>
    %28 = arith.mulf %23, %27 : vector<2x16x8xf32>
    %29 = vector.shape_cast %28 : vector<2x16x8xf32> to vector<32x8xf32>
    %30 = arith.truncf %29 : vector<32x8xf32> to vector<32x8xbf16>
    %cst_14 = arith.constant dense<0.000000e+00> : vector<32x128xf32>
    %31 = tpu.matmul %30, %2, %cst_14 {dimension_numbers = #tpu.dot_dimension_numbers<[1], [0], [0], [1], [0, 0, 1, 1], [], []>} : vector<32x8xbf16>, vector<8x128xbf16>, vector<32x128xf32> -> vector<32x128xf32>
    %32 = vector.shape_cast %31 : vector<32x128xf32> to vector<2x16x128xf32>
    %33 = arith.mulf %32, %14 : vector<2x16x128xf32>
    %cst_15 = arith.constant dense<0.000000e+00> : vector<2x128xf32>
    %34 = vector.multi_reduction <add>, %33, %cst_15 [1] : vector<2x16x128xf32> to vector<2x128xf32>
    %35 = vector.shape_cast %34 : vector<2x128xf32> to vector<2x1x128xf32>
    %36 = vector.broadcast %35 : vector<2x1x128xf32> to vector<2x16x128xf32>
    %37 = arith.mulf %15, %36 : vector<2x16x128xf32>
    %38 = vector.shape_cast %37 : vector<2x16x128xf32> to vector<32x128xf32>
    %39 = arith.truncf %38 : vector<32x128xf32> to vector<32x128xbf16>
    %c0_16 = arith.constant 0 : index
    %c0_17 = arith.constant 0 : index
    %40 = vector.load %arg6[%c0_16, %c0_17] : memref<128x8xbf16, #tpu.memory_space<vmem>>, vector<128x8xbf16>
    %cst_18 = arith.constant dense<0.000000e+00> : vector<32x8xf32>
    %41 = tpu.matmul %39, %40, %cst_18 {dimension_numbers = #tpu.dot_dimension_numbers<[1], [0], [0], [1], [0, 0, 1, 1], [], []>} : vector<32x128xbf16>, vector<128x8xbf16>, vector<32x8xf32> -> vector<32x8xf32>
    %c0_19 = arith.constant 0 : index
    %c0_20 = arith.constant 0 : index
    %42 = vector.load %arg7[%c0_19, %c0_20] : memref<1x8xf32, #tpu.memory_space<vmem>>, vector<1x8xf32>
    %43 = vector.broadcast %42 : vector<1x8xf32> to vector<32x8xf32>
    %44 = arith.addf %41, %43 : vector<32x8xf32>
    %cst_21 = arith.constant 2.500000e-01 : f32
    %45 = vector.broadcast %cst_21 : f32 to vector<32x8xf32>
    %46 = arith.mulf %44, %45 : vector<32x8xf32>
    %47 = vector.shape_cast %46 : vector<32x8xf32> to vector<2x16x8xf32>
    %48 = vector.broadcast %1 : vector<2x16x1xf32> to vector<2x16x8xf32>
    %49 = arith.addf %47, %48 : vector<2x16x8xf32>
    %cst_22 = arith.constant dense<0xFF800000> : vector<2x8xf32>
    %50 = vector.multi_reduction <maximumf>, %49, %cst_22 [1] : vector<2x16x8xf32> to vector<2x8xf32>
    %51 = vector.shape_cast %50 : vector<2x8xf32> to vector<2x1x8xf32>
    %52 = vector.broadcast %51 : vector<2x1x8xf32> to vector<2x16x8xf32>
    %53 = arith.subf %49, %52 : vector<2x16x8xf32>
    %54 = math.exp %53 : vector<2x16x8xf32>
    %cst_23 = arith.constant dense<0.000000e+00> : vector<2x8xf32>
    %55 = vector.multi_reduction <add>, %54, %cst_23 [1] : vector<2x16x8xf32> to vector<2x8xf32>
    %56 = vector.shape_cast %55 : vector<2x8xf32> to vector<2x1x8xf32>
    %57 = tpu.reciprocal %56 {approx = true} : vector<2x1x8xf32> -> vector<2x1x8xf32>
    %58 = vector.broadcast %57 : vector<2x1x8xf32> to vector<2x16x8xf32>
    %59 = arith.mulf %54, %58 : vector<2x16x8xf32>
    %60 = vector.shape_cast %59 : vector<2x16x8xf32> to vector<32x8xf32>
    %61 = arith.truncf %60 : vector<32x8xf32> to vector<32x8xbf16>
    %cst_24 = arith.constant dense<0.000000e+00> : vector<32x128xf32>
    %62 = tpu.matmul %61, %2, %cst_24 {dimension_numbers = #tpu.dot_dimension_numbers<[1], [0], [0], [1], [0, 0, 1, 1], [], []>} : vector<32x8xbf16>, vector<8x128xbf16>, vector<32x128xf32> -> vector<32x128xf32>
    %63 = vector.shape_cast %62 : vector<32x128xf32> to vector<2x16x128xf32>
    %64 = arith.mulf %63, %37 : vector<2x16x128xf32>
    %cst_25 = arith.constant dense<0.000000e+00> : vector<2x128xf32>
    %65 = vector.multi_reduction <add>, %64, %cst_25 [1] : vector<2x16x128xf32> to vector<2x128xf32>
    %66 = vector.shape_cast %65 : vector<2x128xf32> to vector<2x1x128xf32>
    %67 = vector.broadcast %66 : vector<2x1x128xf32> to vector<2x16x128xf32>
    %68 = arith.mulf %67, %14 : vector<2x16x128xf32>
    %69 = vector.shape_cast %68 : vector<2x16x128xf32> to vector<32x128xf32>
    %70 = arith.truncf %69 : vector<32x128xf32> to vector<32x128xbf16>
    %c0_26 = arith.constant 0 : index
    %c0_27 = arith.constant 0 : index
    %71 = vector.load %arg8[%c0_26, %c0_27] : memref<128x128xbf16, #tpu.memory_space<vmem>>, vector<128x128xbf16>
    %cst_28 = arith.constant dense<0.000000e+00> : vector<32x128xf32>
    %72 = tpu.matmul %70, %71, %cst_28 {dimension_numbers = #tpu.dot_dimension_numbers<[1], [0], [0], [1], [0, 0, 1, 1], [], []>} : vector<32x128xbf16>, vector<128x128xbf16>, vector<32x128xf32> -> vector<32x128xf32>
    %c0_29 = arith.constant 0 : index
    %c0_30 = arith.constant 0 : index
    %73 = vector.load %arg9[%c0_29, %c0_30] : memref<1x128xf32, #tpu.memory_space<vmem>>, vector<1x128xf32>
    %74 = vector.broadcast %73 : vector<1x128xf32> to vector<32x128xf32>
    %75 = arith.addf %72, %74 : vector<32x128xf32>
    %76 = vector.shape_cast %75 : vector<32x128xf32> to vector<2x16x128xf32>
    %77 = arith.addf %76, %14 : vector<2x16x128xf32>
    %c0_31 = arith.constant 0 : index
    %c0_32 = arith.constant 0 : index
    %c0_33 = arith.constant 0 : index
    %78 = vector.load %arg10[%c0_31, %c0_32, %c0_33] : memref<2x16x128xf32, #tpu.memory_space<vmem>>, vector<2x16x128xf32>
    tpu.vector_store %arg10[%c0_31, %c0_32, %c0_33], %77 {strides = array<i32>} : memref<2x16x128xf32, #tpu.memory_space<vmem>>, vector<2x16x128xf32>,
    return
  }
  func.func @transform_0(%arg0: i32) -> (i32, i32, i32) {
    %c0_i32 = arith.constant 0 : i32
    %c0_i32_0 = arith.constant 0 : i32
    %c0_i32_1 = arith.constant 0 : i32
    return %arg0, %c0_i32, %c0_i32_0 : i32, i32, i32
  }
  func.func @transform_1(%arg0: i32) -> (i32, i32, i32) {
    %c0_i32 = arith.constant 0 : i32
    %c0_i32_0 = arith.constant 0 : i32
    %c0_i32_1 = arith.constant 0 : i32
    return %arg0, %c0_i32, %c0_i32_0 : i32, i32, i32
  }
  func.func @transform_2(%arg0: i32) -> (i32, i32) {
    %c0_i32 = arith.constant 0 : i32
    %c0_i32_0 = arith.constant 0 : i32
    %c0_i32_1 = arith.constant 0 : i32
    return %c0_i32, %c0_i32_0 : i32, i32
  }
  func.func @transform_3(%arg0: i32) -> (i32, i32) {
    %c0_i32 = arith.constant 0 : i32
    %c0_i32_0 = arith.constant 0 : i32
    %c0_i32_1 = arith.constant 0 : i32
    return %c0_i32, %c0_i32_0 : i32, i32
  }
  func.func @transform_4(%arg0: i32) -> (i32, i32) {
    %c0_i32 = arith.constant 0 : i32
    %c0_i32_0 = arith.constant 0 : i32
    %c0_i32_1 = arith.constant 0 : i32
    return %c0_i32, %c0_i32_0 : i32, i32
  }
  func.func @transform_5(%arg0: i32) -> (i32, i32) {
    %c0_i32 = arith.constant 0 : i32
    %c0_i32_0 = arith.constant 0 : i32
    %c0_i32_1 = arith.constant 0 : i32
    return %c0_i32, %c0_i32_0 : i32, i32
  }
  func.func @transform_6(%arg0: i32) -> (i32, i32) {
    %c0_i32 = arith.constant 0 : i32
    %c0_i32_0 = arith.constant 0 : i32
    %c0_i32_1 = arith.constant 0 : i32
    return %c0_i32, %c0_i32_0 : i32, i32
  }
  func.func @transform_7(%arg0: i32) -> (i32, i32) {
    %c0_i32 = arith.constant 0 : i32
    %c0_i32_0 = arith.constant 0 : i32
    %c0_i32_1 = arith.constant 0 : i32
    return %c0_i32, %c0_i32_0 : i32, i32
  }
  func.func @transform_8(%arg0: i32) -> (i32, i32) {
    %c0_i32 = arith.constant 0 : i32
    %c0_i32_0 = arith.constant 0 : i32
    %c0_i32_1 = arith.constant 0 : i32
    return %c0_i32, %c0_i32_0 : i32, i32
  }
  func.func @transform_9(%arg0: i32) -> (i32, i32, i32) {
    %c0_i32 = arith.constant 0 : i32
    %c0_i32_0 = arith.constant 0 : i32
    %c0_i32_1 = arith.constant 0 : i32
    return %arg0, %c0_i32, %c0_i32_0 : i32, i32, i32
  }
}

module attributes {stable_mosaic.version = 11 : i64} {
  func.func @_fast_self_attention_kernel(%arg0: i32, %arg1: memref<2x16x128xbf16, #tpu.memory_space<vmem>>, %arg2: memref<2x16x1xf32, #tpu.memory_space<vmem>>, %arg3: memref<8x128xbf16, #tpu.memory_space<vmem>>, %arg4: memref<128x264xbf16, #tpu.memory_space<vmem>>, %arg5: memref<1x264xf32, #tpu.memory_space<vmem>>, %arg6: memref<128x8xbf16, #tpu.memory_space<vmem>>, %arg7: memref<1x8xf32, #tpu.memory_space<vmem>>, %arg8: memref<128x128xbf16, #tpu.memory_space<vmem>>, %arg9: memref<1x128xf32, #tpu.memory_space<vmem>>, %arg10: memref<2x16x128xf32, #tpu.memory_space<vmem>>) attributes {dimension_semantics = [#tpu.dimension_semantics<parallel>], iteration_bounds = array<i64: 2>, scalar_prefetch = 0 : i64, scratch_operands = 0 : i64, tpu.core_type = #tpu.core_type<tc>, window_params = [{transform_indices = @transform_0, window_bounds = array<i64: 2, 16, 128>}, {transform_indices = @transform_1, window_bounds = array<i64: 2, 16, 1>}, {pipeline_mode = #tpu.pipeline_mode<synchronous>, transform_indices = @transform_2, window_bounds = array<i64: 8, 128>}, {pipeline_mode = #tpu.pipeline_mode<synchronous>, transform_indices = @transform_3, window_bounds = array<i64: 128, 264>}, {pipeline_mode = #tpu.pipeline_mode<synchronous>, transform_indices = @transform_4, window_bounds = array<i64: 1, 264>}, {pipeline_mode = #tpu.pipeline_mode<synchronous>, transform_indices = @transform_5, window_bounds = array<i64: 128, 8>}, {pipeline_mode = #tpu.pipeline_mode<synchronous>, transform_indices = @transform_6, window_bounds = array<i64: 1, 8>}, {pipeline_mode = #tpu.pipeline_mode<synchronous>, transform_indices = @transform_7, window_bounds = array<i64: 128, 128>}, {pipeline_mode = #tpu.pipeline_mode<synchronous>, transform_indices = @transform_8, window_bounds = array<i64: 1, 128>}, {transform_indices = @transform_9, window_bounds = array<i64: 2, 16, 128>}]} {
    %c0 = arith.constant 0 : index
    %c0_0 = arith.constant 0 : index
    %c0_1 = arith.constant 0 : index
    %0 = vector.load %arg1[%c0, %c0_0, %c0_1] : memref<2x16x128xbf16, #tpu.memory_space<vmem>>, vector<2x16x128xbf16>
    %c0_2 = arith.constant 0 : index
    %c0_3 = arith.constant 0 : index
    %c0_4 = arith.constant 0 : index
    %1 = vector.load %arg2[%c0_2, %c0_3, %c0_4] : memref<2x16x1xf32, #tpu.memory_space<vmem>>, vector<2x16x1xf32>
    %c0_5 = arith.constant 0 : index
    %c0_6 = arith.constant 0 : index
    %2 = vector.load %arg3[%c0_5, %c0_6] : memref<8x128xbf16, #tpu.memory_space<vmem>>, vector<8x128xbf16>
    %3 = vector.shape_cast %0 : vector<2x16x128xbf16> to vector<32x128xbf16>
    %c0_7 = arith.constant 0 : index
    %c0_8 = arith.constant 0 : index
    %4 = vector.load %arg4[%c0_7, %c0_8] : memref<128x264xbf16, #tpu.memory_space<vmem>>, vector<128x264xbf16>
    %cst = arith.constant dense<0.000000e+00> : vector<32x264xf32>
    %5 = tpu.matmul %3, %4, %cst {dimension_numbers = #tpu.dot_dimension_numbers<[1], [0], [0], [1], [0, 0, 1, 1], [], []>} : vector<32x128xbf16>, vector<128x264xbf16>, vector<32x264xf32> -> vector<32x264xf32>
    %c0_9 = arith.constant 0 : index
    %c0_10 = arith.constant 0 : index
    %6 = vector.load %arg5[%c0_9, %c0_10] : memref<1x264xf32, #tpu.memory_space<vmem>>, vector<1x264xf32>
    %7 = vector.broadcast %6 : vector<1x264xf32> to vector<32x264xf32>
    %8 = arith.addf %5, %7 : vector<32x264xf32>
    %9 = vector.extract_strided_slice %8 {offsets = [0, 0], sizes = [32, 128], strides = [1, 1]} : vector<32x264xf32> to vector<32x128xf32>
    %10 = vector.extract_strided_slice %8 {offsets = [0, 128], sizes = [32, 128], strides = [1, 1]} : vector<32x264xf32> to vector<32x128xf32>
    %11 = vector.extract_strided_slice %8 {offsets = [0, 256], sizes = [32, 8], strides = [1, 1]} : vector<32x264xf32> to vector<32x8xf32>
    %cst_11 = arith.constant 2.500000e-01 : f32
    %12 = vector.broadcast %cst_11 : f32 to vector<32x8xf32>
    %13 = arith.mulf %11, %12 : vector<32x8xf32>
    %14 = vector.shape_cast %9 : vector<32x128xf32> to vector<2x16x128xf32>
    %15 = vector.shape_cast %10 : vector<32x128xf32> to vector<2x16x128xf32>
    %16 = vector.shape_cast %13 : vector<32x8xf32> to vector<2x16x8xf32>
    %17 = vector.broadcast %1 : vector<2x16x1xf32> to vector<2x16x8xf32>
    %18 = arith.addf %16, %17 : vector<2x16x8xf32>
    %cst_12 = arith.constant dense<0xFF800000> : vector<2x8xf32>
    %19 = vector.multi_reduction <maximumf>, %18, %cst_12 [1] : vector<2x16x8xf32> to vector<2x8xf32>
    %20 = vector.shape_cast %19 : vector<2x8xf32> to vector<2x1x8xf32>
    %21 = vector.broadcast %20 : vector<2x1x8xf32> to vector<2x16x8xf32>
    %22 = arith.subf %18, %21 : vector<2x16x8xf32>
    %23 = math.exp %22 : vector<2x16x8xf32>
    %cst_13 = arith.constant dense<0.000000e+00> : vector<2x8xf32>
    %24 = vector.multi_reduction <add>, %23, %cst_13 [1] : vector<2x16x8xf32> to vector<2x8xf32>
    %25 = vector.shape_cast %24 : vector<2x8xf32> to vector<2x1x8xf32>
    %26 = tpu.reciprocal %25 {approx = true} : vector<2x1x8xf32> -> vector<2x1x8xf32>
    %27 = vector.broadcast %26 : vector<2x1x8xf32> to vector<2x16x8xf32>
    %28 = arith.mulf %23, %27 : vector<2x16x8xf32>
    %29 = vector.shape_cast %28 : vector<2x16x8xf32> to vector<32x8xf32>
    %30 = arith.truncf %29 : vector<32x8xf32> to vector<32x8xbf16>
    %cst_14 = arith.constant dense<0.000000e+00> : vector<32x128xf32>
    %31 = tpu.matmul %30, %2, %cst_14 {dimension_numbers = #tpu.dot_dimension_numbers<[1], [0], [0], [1], [0, 0, 1, 1], [], []>} : vector<32x8xbf16>, vector<8x128xbf16>, vector<32x128xf32> -> vector<32x128xf32>
    %32 = vector.shape_cast %31 : vector<32x128xf32> to vector<2x16x128xf32>
    %33 = arith.mulf %32, %14 : vector<2x16x128xf32>
    %cst_15 = arith.constant dense<0.000000e+00> : vector<2x128xf32>
    %34 = vector.multi_reduction <add>, %33, %cst_15 [1] : vector<2x16x128xf32> to vector<2x128xf32>
    %35 = vector.shape_cast %34 : vector<2x128xf32> to vector<2x1x128xf32>
    %36 = vector.broadcast %35 : vector<2x1x128xf32> to vector<2x16x128xf32>
    %37 = arith.mulf %15, %36 : vector<2x16x128xf32>
    %38 = vector.shape_cast %37 : vector<2x16x128xf32> to vector<32x128xf32>
    %39 = arith.truncf %38 : vector<32x128xf32> to vector<32x128xbf16>
    %c0_16 = arith.constant 0 : index
    %c0_17 = arith.constant 0 : index
    %40 = vector.load %arg6[%c0_16, %c0_17] : memref<128x8xbf16, #tpu.memory_space<vmem>>, vector<128x8xbf16>
    %cst_18 = arith.constant dense<0.000000e+00> : vector<32x8xf32>
    %41 = tpu.matmul %39, %40, %cst_18 {dimension_numbers = #tpu.dot_dimension_numbers<[1], [0], [0], [1], [0, 0, 1, 1], [], []>} : vector<32x128xbf16>, vector<128x8xbf16>, vector<32x8xf32> -> vector<32x8xf32>
    %c0_19 = arith.constant 0 : index
    %c0_20 = arith.constant 0 : index
    %42 = vector.load %arg7[%c0_19, %c0_20] : memref<1x8xf32, #tpu.memory_space<vmem>>, vector<1x8xf32>
    %43 = vector.broadcast %42 : vector<1x8xf32> to vector<32x8xf32>
    %44 = arith.addf %41, %43 : vector<32x8xf32>
    %cst_21 = arith.constant 2.500000e-01 : f32
    %45 = vector.broadcast %cst_21 : f32 to vector<32x8xf32>
    %46 = arith.mulf %44, %45 : vector<32x8xf32>
    %47 = vector.shape_cast %46 : vector<32x8xf32> to vector<2x16x8xf32>
    %48 = vector.broadcast %1 : vector<2x16x1xf32> to vector<2x16x8xf32>
    %49 = arith.addf %47, %48 : vector<2x16x8xf32>
    %cst_22 = arith.constant dense<0xFF800000> : vector<2x8xf32>
    %50 = vector.multi_reduction <maximumf>, %49, %cst_22 [1] : vector<2x16x8xf32> to vector<2x8xf32>
    %51 = vector.shape_cast %50 : vector<2x8xf32> to vector<2x1x8xf32>
    %52 = vector.broadcast %51 : vector<2x1x8xf32> to vector<2x16x8xf32>
    %53 = arith.subf %49, %52 : vector<2x16x8xf32>
    %54 = math.exp %53 : vector<2x16x8xf32>
    %cst_23 = arith.constant dense<0.000000e+00> : vector<2x8xf32>
    %55 = vector.multi_reduction <add>, %54, %cst_23 [1] : vector<2x16x8xf32> to vector<2x8xf32>
    %56 = vector.shape_cast %55 : vector<2x8xf32> to vector<2x1x8xf32>
    %57 = tpu.reciprocal %56 {approx = true} : vector<2x1x8xf32> -> vector<2x1x8xf32>
    %58 = vector.broadcast %57 : vector<2x1x8xf32> to vector<2x16x8xf32>
    %59 = arith.mulf %54, %58 : vector<2x16x8xf32>
    %60 = vector.shape_cast %59 : vector<2x16x8xf32> to vector<32x8xf32>
    %61 = arith.truncf %60 : vector<32x8xf32> to vector<32x8xbf16>
    %cst_24 = arith.constant dense<0.000000e+00> : vector<32x128xf32>
    %62 = tpu.matmul %61, %2, %cst_24 {dimension_numbers = #tpu.dot_dimension_numbers<[1], [0], [0], [1], [0, 0, 1, 1], [], []>} : vector<32x8xbf16>, vector<8x128xbf16>, vector<32x128xf32> -> vector<32x128xf32>
    %63 = vector.shape_cast %62 : vector<32x128xf32> to vector<2x16x128xf32>
    %64 = arith.mulf %63, %37 : vector<2x16x128xf32>
    %cst_25 = arith.constant dense<0.000000e+00> : vector<2x128xf32>
    %65 = vector.multi_reduction <add>, %64, %cst_25 [1] : vector<2x16x128xf32> to vector<2x128xf32>
    %66 = vector.shape_cast %65 : vector<2x128xf32> to vector<2x1x128xf32>
    %67 = vector.broadcast %66 : vector<2x1x128xf32> to vector<2x16x128xf32>
    %68 = arith.mulf %67, %14 : vector<2x16x128xf32>
    %69 = vector.shape_cast %68 : vector<2x16x128xf32> to vector<32x128xf32>
    %70 = arith.truncf %69 : vector<32x128xf32> to vector<32x128xbf16>
    %c0_26 = arith.constant 0 : index
    %c0_27 = arith.constant 0 : index
    %71 = vector.load %arg8[%c0_26, %c0_27] : memref<128x128xbf16, #tpu.memory_space<vmem>>, vector<128x128xbf16>
    %cst_28 = arith.constant dense<0.000000e+00> : vector<32x128xf32>
    %72 = tpu.matmul %70, %71, %cst_28 {dimension_numbers = #tpu.dot_dimension_numbers<[1], [0], [0], [1], [0, 0, 1, 1], [], []>} : vector<32x128xbf16>, vector<128x128xbf16>, vector<32x128xf32> -> vector<32x128xf32>
    %c0_29 = arith.constant 0 : index
    %c0_30 = arith.constant 0 : index
    %73 = vector.load %arg9[%c0_29, %c0_30] : memref<1x128xf32, #tpu.memory_space<vmem>>, vector<1x128xf32>
    %74 = vector.broadcast %73 : vector<1x128xf32> to vector<32x128xf32>
    %75 = arith.addf %72, %74 : vector<32x128xf32>
    %76 = vector.shape_cast %75 : vector<32x128xf32> to vector<2x16x128xf32>
    %77 = arith.addf %76, %14 : vector<2x16x128xf32>
    %c0_31 = arith.constant 0 : index
    %c0_32 = arith.constant 0 : index
    %c0_33 = arith.constant 0 : index
    %78 = vector.load %arg10[%c0_31, %c0_32, %c0_33] : memref<2x16x128xf32, #tpu.memory_space<vmem>>, vector<2x16x128xf32>
    tpu.vector_store %arg10[%c0_31, %c0_32, %c0_33], %77 {strides = array<i32>} : memref<2x16x128xf32, #tpu.memory_space<vmem>>, vector<2x16x128xf32>,
    return
  }
  func.func @transform_0(%arg0: i32) -> (i32, i32, i32) {
    %c0_i32 = arith.constant 0 : i32
    %c0_i32_0 = arith.constant 0 : i32
    %c0_i32_1 = arith.constant 0 : i32
    return %arg0, %c0_i32, %c0_i32_0 : i32, i32, i32
  }
  func.func @transform_1(%arg0: i32) -> (i32, i32, i32) {
    %c0_i32 = arith.constant 0 : i32
    %c0_i32_0 = arith.constant 0 : i32
    %c0_i32_1 = arith.constant 0 : i32
    return %arg0, %c0_i32, %c0_i32_0 : i32, i32, i32
  }
  func.func @transform_2(%arg0: i32) -> (i32, i32) {
    %c0_i32 = arith.constant 0 : i32
    %c0_i32_0 = arith.constant 0 : i32
    %c0_i32_1 = arith.constant 0 : i32
    return %c0_i32, %c0_i32_0 : i32, i32
  }
  func.func @transform_3(%arg0: i32) -> (i32, i32) {
    %c0_i32 = arith.constant 0 : i32
    %c0_i32_0 = arith.constant 0 : i32
    %c0_i32_1 = arith.constant 0 : i32
    return %c0_i32, %c0_i32_0 : i32, i32
  }
  func.func @transform_4(%arg0: i32) -> (i32, i32) {
    %c0_i32 = arith.constant 0 : i32
    %c0_i32_0 = arith.constant 0 : i32
    %c0_i32_1 = arith.constant 0 : i32
    return %c0_i32, %c0_i32_0 : i32, i32
  }
  func.func @transform_5(%arg0: i32) -> (i32, i32) {
    %c0_i32 = arith.constant 0 : i32
    %c0_i32_0 = arith.constant 0 : i32
    %c0_i32_1 = arith.constant 0 : i32
    return %c0_i32, %c0_i32_0 : i32, i32
  }
  func.func @transform_6(%arg0: i32) -> (i32, i32) {
    %c0_i32 = arith.constant 0 : i32
    %c0_i32_0 = arith.constant 0 : i32
    %c0_i32_1 = arith.constant 0 : i32
    return %c0_i32, %c0_i32_0 : i32, i32
  }
  func.func @transform_7(%arg0: i32) -> (i32, i32) {
    %c0_i32 = arith.constant 0 : i32
    %c0_i32_0 = arith.constant 0 : i32
    %c0_i32_1 = arith.constant 0 : i32
    return %c0_i32, %c0_i32_0 : i32, i32
  }
  func.func @transform_8(%arg0: i32) -> (i32, i32) {
    %c0_i32 = arith.constant 0 : i32
    %c0_i32_0 = arith.constant 0 : i32
    %c0_i32_1 = arith.constant 0 : i32
    return %c0_i32, %c0_i32_0 : i32, i32
  }
  func.func @transform_9(%arg0: i32) -> (i32, i32, i32) {
    %c0_i32 = arith.constant 0 : i32
    %c0_i32_0 = arith.constant 0 : i32
    %c0_i32_1 = arith.constant 0 : i32
    return %arg0, %c0_i32, %c0_i32_0 : i32, i32, i32
  }
}

</mosaic_0001>

<llo_original>
// kernel: tpu_custom_call.1
$region0: #{tpu_custom_call.1}
  #allocation0 [shape = 'u32[]', space=smem, size = 0x4, offset = 0x4, fixed_abs, tag = 'smem constant byte address 0x4 - core index']
  #allocation1 [shape = 'u32[144,128]{1,0:T(1,128)}', space=vmem, size = 0x12000, scoped, tag = 'internal scratch']
  %s0 = inlined_call_operand.vmem [shape: bf16[4,16,128], index: 0, kind: input, shape index: {}]
  %s1 = inlined_call_operand.vmem [shape: f32[4,16,1], index: 1, kind: input, shape index: {}]
  %s2 = inlined_call_operand.vmem [shape: bf16[8,128], index: 2, kind: input, shape index: {}]
  %s3 = inlined_call_operand.vmem [shape: bf16[128,264], index: 3, kind: input, shape index: {}]
  %s4 = inlined_call_operand.vmem [shape: f32[1,264], index: 4, kind: input, shape index: {}]
  %s5 = inlined_call_operand.vmem [shape: bf16[128,8], index: 5, kind: input, shape index: {}]
  %s6 = inlined_call_operand.vmem [shape: f32[1,8], index: 6, kind: input, shape index: {}]
  %s7 = inlined_call_operand.vmem [shape: bf16[128,128], index: 7, kind: input, shape index: {}]
  %s8 = inlined_call_operand.vmem [shape: f32[1,128], index: 8, kind: input, shape index: {}]
  %s9 = inlined_call_operand.hbm [shape: f32[4,16,128], index: 9, kind: output, shape index: {}]
  %s10 = sld [smem:[#allocation0]]
  $region69: #{tpu_custom_call.1} parent=0
    _
  %s12 = ssub.s32 1, %s10
  %s13 = scalar_select 0, %s12, %s10
  $region1: #{tpu_custom_call.1} parent=0
    #allocation2 [shape = 'u8[32768]{0}', space=vmem, size = 0x8000, scoped, tag = 'output window, operand 0']
    #allocation3 [shape = 's32[2]{0}', space=sflag, size = 0x8, scoped, tag = 'scoped memory for tpu_custom_call.1']
    %14 = vsyncpa [#allocation3], 0
    %s15 = scalar_lea.sflag [#allocation3], 1
    %16 = vsyncpa %s15, 0
    loop: start=0, step=1, limit=4
    $region2: #{tpu_custom_call.1} parent=1 // loop_pre_header
      _
    $region3: #{tpu_custom_call.1} parent=1 // loop_header
      %s18 = sphi 0, %s22
      %p19 = scmp.ge.s32.totalorder %s18, 4
      %s28 = sphi 0, %s30
      %s31 = sphi 0, %s28
      %s32 = sphi 0, %s31
      %s48 = sphi 0, %s32
      %s54 = sphi 0, %s56
      %s57 = sphi 0, %s54
      %s58 = sphi 0, %s57
      %s74 = sphi 0, %s58
      %s78 = sphi 0, %s78
      %s80 = sphi 0, %s78
      %s81 = sphi 0, %s80
      %s95 = sphi 0, %s81
      %s99 = sphi 0, %s99
      %s101 = sphi 0, %s99
      %s102 = sphi 0, %s101
      %s116 = sphi 0, %s102
      %s120 = sphi 0, %s120
      %s122 = sphi 0, %s120
      %s123 = sphi 0, %s122
      %s137 = sphi 0, %s123
      %s141 = sphi 0, %s141
      %s143 = sphi 0, %s141
      %s144 = sphi 0, %s143
      %s158 = sphi 0, %s144
      %s162 = sphi 0, %s162
      %s164 = sphi 0, %s162
      %s165 = sphi 0, %s164
      %s179 = sphi 0, %s165
      %s183 = sphi 0, %s183
      %s185 = sphi 0, %s183
      %s186 = sphi 0, %s185
      %s200 = sphi 0, %s186
      %s204 = sphi 0, %s204
      %s206 = sphi 0, %s204
      %s207 = sphi 0, %s206
      %s221 = sphi 0, %s207
      %s227 = sphi 0, %s229
      %s230 = sphi 0, %s227
      %s231 = sphi 0, %s230
      %s247 = sphi 0, %s231
    $region4: #{tpu_custom_call.1} parent=1 // loop_header_branch
      %21 = sbr.rel (%p19) target = $region8
    $region5: #{tpu_custom_call.1} parent=1 // loop_body
      %s23 = ssub.s32 %s18, 1
      %s24 = ssub.s32 %s18, 2
      %s25 = sadd.s32 %s18, 1
      %s26 = ssub.s32 %s18, %s25
      %p27 = scmp.eq.s32.totalorder %s26, 0
      %s29 = sadd.s32 %s28, 1
      %s30 = scalar_select %p27, %s28, %s29
      %p33 = pneg %p27
      %p34 = scmp.eq.s32.totalorder %s18, 1
      %p35 = por %p33, %p34
      %p36 = scmp.ne.s32.totalorder %s28, %s31
      %p37 = scmp.eq.s32.totalorder %s18, 0
      %p38 = por %p36, %p37
      %p39 = scmp.ne.s32.totalorder %s28, %s31
      %p40 = scmp.eq.s32.totalorder %s23, 1
      %p41 = por %p39, %p40
      %p42 = scmp.ne.s32.totalorder %s31, %s32
      %p43 = scmp.eq.s32.totalorder %s23, 0
      %p44 = por %p42, %p43
      %p45 = scmp.ne.s32.totalorder %s31, %s32
      %p46 = scmp.eq.s32.totalorder %s24, 1
      %p47 = por %p45, %p46
      %p49 = scmp.ne.s32.totalorder %s32, %s48
      %p50 = scmp.eq.s32.totalorder %s24, 0
      %p51 = por %p49, %p50
      %s52 = ssub.s32 %s18, %s25
      %p53 = scmp.eq.s32.totalorder %s52, 0
      %s55 = sadd.s32 %s54, 1
      %s56 = scalar_select %p53, %s54, %s55
      %p59 = pneg %p53
      %p60 = scmp.eq.s32.totalorder %s18, 1
      %p61 = por %p59, %p60
      %p62 = scmp.ne.s32.totalorder %s54, %s57
      %p63 = scmp.eq.s32.totalorder %s18, 0
      %p64 = por %p62, %p63
      %p65 = scmp.ne.s32.totalorder %s54, %s57
      %p66 = scmp.eq.s32.totalorder %s23, 1
      %p67 = por %p65, %p66
      %p68 = scmp.ne.s32.totalorder %s57, %s58
      %p69 = scmp.eq.s32.totalorder %s23, 0
      %p70 = por %p68, %p69
      %p71 = scmp.ne.s32.totalorder %s57, %s58
      %p72 = scmp.eq.s32.totalorder %s24, 1
      %p73 = por %p71, %p72
      %p75 = scmp.ne.s32.totalorder %s58, %s74
      %p76 = scmp.eq.s32.totalorder %s24, 0
      %p77 = por %p75, %p76
      %s79 = sadd.s32 %s78, 1
      %p82 = scmp.eq.s32.totalorder %s18, 1
      %p83 = scmp.ne.s32.totalorder %s78, %s80
      %p84 = scmp.eq.s32.totalorder %s18, 0
      %p85 = por %p83, %p84
      %p86 = scmp.ne.s32.totalorder %s78, %s80
      %p87 = scmp.eq.s32.totalorder %s23, 1
      %p88 = por %p86, %p87
      %p89 = scmp.ne.s32.totalorder %s80, %s81
      %p90 = scmp.eq.s32.totalorder %s23, 0
      %p91 = por %p89, %p90
      %p92 = scmp.ne.s32.totalorder %s80, %s81
      %p93 = scmp.eq.s32.totalorder %s24, 1
      %p94 = por %p92, %p93
      %p96 = scmp.ne.s32.totalorder %s81, %s95
      %p97 = scmp.eq.s32.totalorder %s24, 0
      %p98 = por %p96, %p97
      %s100 = sadd.s32 %s99, 1
      %p103 = scmp.eq.s32.totalorder %s18, 1
      %p104 = scmp.ne.s32.totalorder %s99, %s101
      %p105 = scmp.eq.s32.totalorder %s18, 0
      %p106 = por %p104, %p105
      %p107 = scmp.ne.s32.totalorder %s99, %s101
      %p108 = scmp.eq.s32.totalorder %s23, 1
      %p109 = por %p107, %p108
      %p110 = scmp.ne.s32.totalorder %s101, %s102
      %p111 = scmp.eq.s32.totalorder %s23, 0
      %p112 = por %p110, %p111
      %p113 = scmp.ne.s32.totalorder %s101, %s102
      %p114 = scmp.eq.s32.totalorder %s24, 1
      %p115 = por %p113, %p114
      %p117 = scmp.ne.s32.totalorder %s102, %s116
      %p118 = scmp.eq.s32.totalorder %s24, 0
      %p119 = por %p117, %p118
      %s121 = sadd.s32 %s120, 1
      %p124 = scmp.eq.s32.totalorder %s18, 1
      %p125 = scmp.ne.s32.totalorder %s120, %s122
      %p126 = scmp.eq.s32.totalorder %s18, 0
      %p127 = por %p125, %p126
      %p128 = scmp.ne.s32.totalorder %s120, %s122
      %p129 = scmp.eq.s32.totalorder %s23, 1
      %p130 = por %p128, %p129
      %p131 = scmp.ne.s32.totalorder %s122, %s123
      %p132 = scmp.eq.s32.totalorder %s23, 0
      %p133 = por %p131, %p132
      %p134 = scmp.ne.s32.totalorder %s122, %s123
      %p135 = scmp.eq.s32.totalorder %s24, 1
      %p136 = por %p134, %p135
      %p138 = scmp.ne.s32.totalorder %s123, %s137
      %p139 = scmp.eq.s32.totalorder %s24, 0
      %p140 = por %p138, %p139
      %s142 = sadd.s32 %s141, 1
      %p145 = scmp.eq.s32.totalorder %s18, 1
      %p146 = scmp.ne.s32.totalorder %s141, %s143
      %p147 = scmp.eq.s32.totalorder %s18, 0
      %p148 = por %p146, %p147
      %p149 = scmp.ne.s32.totalorder %s141, %s143
      %p150 = scmp.eq.s32.totalorder %s23, 1
      %p151 = por %p149, %p150
      %p152 = scmp.ne.s32.totalorder %s143, %s144
      %p153 = scmp.eq.s32.totalorder %s23, 0
      %p154 = por %p152, %p153
      %p155 = scmp.ne.s32.totalorder %s143, %s144
      %p156 = scmp.eq.s32.totalorder %s24, 1
      %p157 = por %p155, %p156
      %p159 = scmp.ne.s32.totalorder %s144, %s158
      %p160 = scmp.eq.s32.totalorder %s24, 0
      %p161 = por %p159, %p160
      %s163 = sadd.s32 %s162, 1
      %p166 = scmp.eq.s32.totalorder %s18, 1
      %p167 = scmp.ne.s32.totalorder %s162, %s164
      %p168 = scmp.eq.s32.totalorder %s18, 0
      %p169 = por %p167, %p168
      %p170 = scmp.ne.s32.totalorder %s162, %s164
      %p171 = scmp.eq.s32.totalorder %s23, 1
      %p172 = por %p170, %p171
      %p173 = scmp.ne.s32.totalorder %s164, %s165
      %p174 = scmp.eq.s32.totalorder %s23, 0
      %p175 = por %p173, %p174
      %p176 = scmp.ne.s32.totalorder %s164, %s165
      %p177 = scmp.eq.s32.totalorder %s24, 1
      %p178 = por %p176, %p177
      %p180 = scmp.ne.s32.totalorder %s165, %s179
      %p181 = scmp.eq.s32.totalorder %s24, 0
      %p182 = por %p180, %p181
      %s184 = sadd.s32 %s183, 1
      %p187 = scmp.eq.s32.totalorder %s18, 1
      %p188 = scmp.ne.s32.totalorder %s183, %s185
      %p189 = scmp.eq.s32.totalorder %s18, 0
      %p190 = por %p188, %p189
      %p191 = scmp.ne.s32.totalorder %s183, %s185
      %p192 = scmp.eq.s32.totalorder %s23, 1
      %p193 = por %p191, %p192
      %p194 = scmp.ne.s32.totalorder %s185, %s186
      %p195 = scmp.eq.s32.totalorder %s23, 0
      %p196 = por %p194, %p195
      %p197 = scmp.ne.s32.totalorder %s185, %s186
      %p198 = scmp.eq.s32.totalorder %s24, 1
      %p199 = por %p197, %p198
      %p201 = scmp.ne.s32.totalorder %s186, %s200
      %p202 = scmp.eq.s32.totalorder %s24, 0
      %p203 = por %p201, %p202
      %s205 = sadd.s32 %s204, 1
      %p208 = scmp.eq.s32.totalorder %s18, 1
      %p209 = scmp.ne.s32.totalorder %s204, %s206
      %p210 = scmp.eq.s32.totalorder %s18, 0
      %p211 = por %p209, %p210
      %p212 = scmp.ne.s32.totalorder %s204, %s206
      %p213 = scmp.eq.s32.totalorder %s23, 1
      %p214 = por %p212, %p213
      %p215 = scmp.ne.s32.totalorder %s206, %s207
      %p216 = scmp.eq.s32.totalorder %s23, 0
      %p217 = por %p215, %p216
      %p218 = scmp.ne.s32.totalorder %s206, %s207
      %p219 = scmp.eq.s32.totalorder %s24, 1
      %p220 = por %p218, %p219
      %p222 = scmp.ne.s32.totalorder %s207, %s221
      %p223 = scmp.eq.s32.totalorder %s24, 0
      %p224 = por %p222, %p223
      %s225 = ssub.s32 %s18, %s25
      %p226 = scmp.eq.s32.totalorder %s225, 0
      %s228 = sadd.s32 %s227, 1
      %s229 = scalar_select %p226, %s227, %s228
      %p232 = pneg %p226
      %p233 = scmp.eq.s32.totalorder %s18, 1
      %p234 = por %p232, %p233
      %p235 = scmp.ne.s32.totalorder %s227, %s230
      %p236 = scmp.eq.s32.totalorder %s18, 0
      %p237 = por %p235, %p236
      %p238 = scmp.ne.s32.totalorder %s227, %s230
      %p239 = scmp.eq.s32.totalorder %s23, 1
      %p240 = por %p238, %p239
      %p241 = scmp.ne.s32.totalorder %s230, %s231
      %p242 = scmp.eq.s32.totalorder %s23, 0
      %p243 = por %p241, %p242
      %p244 = scmp.ne.s32.totalorder %s230, %s231
      %p245 = scmp.eq.s32.totalorder %s24, 1
      %p246 = por %p244, %p245
      %p248 = scmp.ne.s32.totalorder %s231, %s247
      %p249 = scmp.eq.s32.totalorder %s24, 0
      %p250 = por %p248, %p249
      %p251 = scmp.le.s32.totalorder 1, %s18
      %p252 = scmp.lt.s32.totalorder %s18, 3
      %p253 = pnand %p251, %p252
      %p254 = pneg %p253
      // Predicated region
      $region9: #{tpu_custom_call.1} parent=5 // pred_check
        _
      $region10: #{tpu_custom_call.1} parent=5 // pred_check_branch
        %256 = sbr.rel (%p253) target = $region12
      $region11: #{tpu_custom_call.1} parent=5 // pred_region
        %s257 = ssub.s32 %s18, 1
        // Predicated region
        $region13: #{tpu_custom_call.1} parent=11 // pred_check
          %p258 = pneg %p91
        $region14: #{tpu_custom_call.1} parent=11 // pred_check_branch
          %260 = sbr.rel (%p258) target = $region16
        $region15: #{tpu_custom_call.1} parent=11 // pred_region
          _
        $region16: #{tpu_custom_call.1} parent=11 // pred_fallthru
          _
        // Predicated region
        $region17: #{tpu_custom_call.1} parent=11 // pred_check
          %p261 = pneg %p112
        $region18: #{tpu_custom_call.1} parent=11 // pred_check_branch
          %263 = sbr.rel (%p261) target = $region20
        $region19: #{tpu_custom_call.1} parent=11 // pred_region
          _
        $region20: #{tpu_custom_call.1} parent=11 // pred_fallthru
          _
        // Predicated region
        $region21: #{tpu_custom_call.1} parent=11 // pred_check
          %p264 = pneg %p133
        $region22: #{tpu_custom_call.1} parent=11 // pred_check_branch
          %266 = sbr.rel (%p264) target = $region24
        $region23: #{tpu_custom_call.1} parent=11 // pred_region
          _
        $region24: #{tpu_custom_call.1} parent=11 // pred_fallthru
          _
        // Predicated region
        $region25: #{tpu_custom_call.1} parent=11 // pred_check
          %p267 = pneg %p154
        $region26: #{tpu_custom_call.1} parent=11 // pred_check_branch
          %269 = sbr.rel (%p267) target = $region28
        $region27: #{tpu_custom_call.1} parent=11 // pred_region
          _
        $region28: #{tpu_custom_call.1} parent=11 // pred_fallthru
          _
        // Predicated region
        $region29: #{tpu_custom_call.1} parent=11 // pred_check
          %p270 = pneg %p175
        $region30: #{tpu_custom_call.1} parent=11 // pred_check_branch
          %272 = sbr.rel (%p270) target = $region32
        $region31: #{tpu_custom_call.1} parent=11 // pred_region
          _
        $region32: #{tpu_custom_call.1} parent=11 // pred_fallthru
          _
        // Predicated region
        $region33: #{tpu_custom_call.1} parent=11 // pred_check
          %p273 = pneg %p196
        $region34: #{tpu_custom_call.1} parent=11 // pred_check_branch
          %275 = sbr.rel (%p273) target = $region36
        $region35: #{tpu_custom_call.1} parent=11 // pred_region
          _
        $region36: #{tpu_custom_call.1} parent=11 // pred_fallthru
          _
        // Predicated region
        $region37: #{tpu_custom_call.1} parent=11 // pred_check
          %p276 = pneg %p217
        $region38: #{tpu_custom_call.1} parent=11 // pred_check_branch
          %278 = sbr.rel (%p276) target = $region40
        $region39: #{tpu_custom_call.1} parent=11 // pred_region
          _
        $region40: #{tpu_custom_call.1} parent=11 // pred_fallthru
          _
      $region12: #{tpu_custom_call.1} parent=5 // pred_fallthru
        _
      %p279 = scmp.lt.s32.totalorder %s18, 2
      // Predicated region
      $region41: #{tpu_custom_call.1} parent=5 // pred_check
        %p280 = pneg %p279
      $region42: #{tpu_custom_call.1} parent=5 // pred_check_branch
        %282 = sbr.rel (%p280) target = $region44
      $region43: #{tpu_custom_call.1} parent=5 // pred_region
        // Predicated region
        $region45: #{tpu_custom_call.1} parent=43 // pred_check
          %p283 = pneg %p38
        $region46: #{tpu_custom_call.1} parent=43 // pred_check_branch
          %285 = sbr.rel (%p283) target = $region48
        $region47: #{tpu_custom_call.1} parent=43 // pred_region
          %s286 = smul.u32 2, %s18
          %p287 = scmp.lt.s32.totalorder %s286, 3
          %s288 = scalar_select %p287, %s286, 3
          %s289 = smul.addr %s288, 2
          %s290 = smul.addr %s289, 4
          %s291 = scalar_lea.vmem %s0, %s290
          %s292 = smul.u32 2, %s18
        $region48: #{tpu_custom_call.1} parent=43 // pred_fallthru
          _
        // Predicated region
        $region49: #{tpu_custom_call.1} parent=43 // pred_check
          %p293 = pneg %p64
        $region50: #{tpu_custom_call.1} parent=43 // pred_check_branch
          %295 = sbr.rel (%p293) target = $region52
        $region51: #{tpu_custom_call.1} parent=43 // pred_region
          %s296 = smul.u32 2, %s18
          %p297 = scmp.lt.s32.totalorder %s296, 3
          %s298 = scalar_select %p297, %s296, 3
          %s299 = smul.addr %s298, 2
          %s300 = smul.addr %s299, 8
          %s301 = scalar_lea.vmem %s1, %s300
          %s302 = smul.u32 2, %s18
        $region52: #{tpu_custom_call.1} parent=43 // pred_fallthru
          _
      $region44: #{tpu_custom_call.1} parent=5 // pred_fallthru
        _
      %p303 = scmp.le.s32.totalorder 1, %s18
      %p304 = scmp.lt.s32.totalorder %s18, 3
      %p305 = pnand %p303, %p304
      %p306 = pneg %p305
      // Predicated region
      $region53: #{tpu_custom_call.1} parent=5 // pred_check
        _
      $region54: #{tpu_custom_call.1} parent=5 // pred_check_branch
        %308 = sbr.rel (%p305) target = $region56
      $region55: #{tpu_custom_call.1} parent=5 // pred_region
        %s309 = ssub.s32 %s18, 1
        %s310 = smul.u32 2, %s23
        %p311 = scmp.lt.s32.totalorder %s310, 3
        %s312 = scalar_select %p311, %s310, 3
        %s313 = smul.addr %s312, 2
        %s314 = smul.addr %s313, 4
        %s315 = scalar_lea.vmem %s0, %s314
        %p316 = pneg %p44
        %p317 = pneg %p41
        %s318 = smul.u32 2, %s23
        %p319 = scmp.lt.s32.totalorder %s318, 3
        %s320 = scalar_select %p319, %s318, 3
        %s321 = smul.addr %s320, 2
        %s322 = smul.addr %s321, 8
        %s323 = scalar_lea.vmem %s1, %s322
        %p324 = pneg %p70
        %p325 = pneg %p67
        %p326 = pneg %p91
        %p327 = pneg %p88
        %p328 = pneg %p112
        %p329 = pneg %p109
        %p330 = pneg %p133
        %p331 = pneg %p130
        %p332 = pneg %p154
        %p333 = pneg %p151
        %p334 = pneg %p175
        %p335 = pneg %p172
        %p336 = pneg %p196
        %p337 = pneg %p193
        %p338 = pneg %p217
        %p339 = pneg %p214
        %p340 = pneg %p243
        %p341 = pneg %p240
        %s342 = sand.u32 %s230, 1
        %s343 = scalar_lea.sflag [#allocation3], %s342
        %s344 = sand.u32 %s230, 1
        %s345 = smul.addr %s344, 32
        %s346 = scalar_lea.vmem [#allocation2], %s345
        %s347 = smul.u32 2, %s23
        %p348 = scmp.lt.s32.totalorder %s347, 3
        %s349 = scalar_select %p348, %s347, 3
        %s350 = smul.addr %s349, 2
        %s351 = smul.addr %s350, 4
        %s352 = scalar_lea.vmem %s0, %s351
        %s353 = smul.u32 2, %s23
        %s354 = smul.u32 2, %s23
        %p355 = scmp.lt.s32.totalorder %s354, 3
        %s356 = scalar_select %p355, %s354, 3
        %s357 = smul.addr %s356, 2
        %s358 = smul.addr %s357, 8
        %s359 = scalar_lea.vmem %s1, %s358
        %s360 = smul.u32 2, %s23
        %s361 = smul.u32 2, %s23
        %v363 = vld [vmem:[%s352] sm:$0xf]
        %v364 = vld [vmem:[%s352 + $0x4] sm:$0xf]
        %v365 = vld [vmem:[%s352 + $0x8] sm:$0xf]
        %v366 = vld [vmem:[%s352 + $0xc] sm:$0xf]
        %v367 = vld [vmem:[%s359] sm:$0xff]
        %v368 = vld [vmem:[%s359 + $0x8] sm:$0xff]
        %v369 = vld [vmem:[%s359 + $0x10] sm:$0xff]
        %v370 = vld [vmem:[%s359 + $0x18] sm:$0xff]
        %v371 = vld [vmem:[%s2] sm:$0xf]
        %v372 = vld [vmem:[%s3] sm:$0xff]
        %v373 = vld [vmem:[%s3 + $0x8] sm:$0xf]
        %v374 = vld [vmem:[%s3 + $0xc] sm:$0xff]
        %v375 = vld [vmem:[%s3 + $0x14] sm:$0xf]
        %v376 = vld [vmem:[%s3 + $0x18] sm:$0xff]
        %v377 = vld [vmem:[%s3 + $0x20] sm:$0xf]
        %v378 = vld [vmem:[%s3 + $0x24] sm:$0xff]
        %v379 = vld [vmem:[%s3 + $0x2c] sm:$0xf]
        %v380 = vld [vmem:[%s3 + $0x30] sm:$0xff]
        %v381 = vld [vmem:[%s3 + $0x38] sm:$0xf]
        %v382 = vld [vmem:[%s3 + $0x3c] sm:$0xff]
        %v383 = vld [vmem:[%s3 + $0x44] sm:$0xf]
        %v384 = vld [vmem:[%s3 + $0x48] sm:$0xff]
        %v385 = vld [vmem:[%s3 + $0x50] sm:$0xf]
        %v386 = vld [vmem:[%s3 + $0x54] sm:$0xff]
        %v387 = vld [vmem:[%s3 + $0x5c] sm:$0xf]
        %v388 = vld [vmem:[%s3 + $0x60] sm:$0xff]
        %v389 = vld [vmem:[%s3 + $0x68] sm:$0xf]
        %v390 = vld [vmem:[%s3 + $0x6c] sm:$0xff]
        %v391 = vld [vmem:[%s3 + $0x74] sm:$0xf]
        %v392 = vld [vmem:[%s3 + $0x78] sm:$0xff]
        %v393 = vld [vmem:[%s3 + $0x80] sm:$0xf]
        %v394 = vld [vmem:[%s3 + $0x84] sm:$0xff]
        %v395 = vld [vmem:[%s3 + $0x8c] sm:$0xf]
        %v396 = vld [vmem:[%s3 + $0x90] sm:$0xff]
        %v397 = vld [vmem:[%s3 + $0x98] sm:$0xf]
        %v398 = vld [vmem:[%s3 + $0x9c] sm:$0xff]
        %v399 = vld [vmem:[%s3 + $0xa4] sm:$0xf]
        %v400 = vld [vmem:[%s3 + $0xa8] sm:$0xff]
        %v401 = vld [vmem:[%s3 + $0xb0] sm:$0xf]
        %v402 = vld [vmem:[%s3 + $0xb4] sm:$0xff]
        %v403 = vld [vmem:[%s3 + $0xbc] sm:$0xf]
        %v404 = vld [vmem:[%s4] sm:$0x7]
        %v406 = vlaneseq
        %v407 = vshrl.u32 %v406, 7
        %v408 = vsub.s32 0, %v407
        %v409 = vrot.slane %v404, %v408
        %v410 = vlaneseq
        %v411 = vshrl.u32 %v410, 7
        %v412 = vsub.s32 1, %v411
        %v413 = vrot.slane %v404, %v412
        %v414 = vlaneseq
        %v415 = vshrl.u32 %v414, 7
        %v416 = vsub.s32 2, %v415
        %v417 = vrot.slane %v404, %v416
        %v425 = vunpack.c.l.b16 %v363
        %v426 = vunpack.c.l.b16 %v364
        %v427 = vunpack.c.l.b16 %v365
        %v428 = vunpack.c.l.b16 %v366
        %v429 = vpack.c.b16 %v426, %v425
        %v430 = vpack.c.b16 %v428, %v427
        %v465 = vunpack.c.l.b16 %v372
        %v466 = vunpack.c.h.b16 %v372
        %v467 = vunpack.c.l.b16 %v373
        %v468 = vunpack.c.l.b16 %v374
        %v469 = vunpack.c.h.b16 %v374
        %v470 = vunpack.c.l.b16 %v375
        %v471 = vunpack.c.l.b16 %v376
        %v472 = vunpack.c.h.b16 %v376
        %v473 = vunpack.c.l.b16 %v377
        %v474 = vunpack.c.l.b16 %v378
        %v475 = vunpack.c.h.b16 %v378
        %v476 = vunpack.c.l.b16 %v379
        %v477 = vunpack.c.l.b16 %v380
        %v478 = vunpack.c.h.b16 %v380
        %v479 = vunpack.c.l.b16 %v381
        %v480 = vunpack.c.l.b16 %v382
        %v481 = vunpack.c.h.b16 %v382
        %v482 = vunpack.c.l.b16 %v383
        %v483 = vunpack.c.l.b16 %v384
        %v484 = vunpack.c.h.b16 %v384
        %v485 = vunpack.c.l.b16 %v385
        %v486 = vunpack.c.l.b16 %v386
        %v487 = vunpack.c.h.b16 %v386
        %v488 = vunpack.c.l.b16 %v387
        %v489 = vunpack.c.l.b16 %v388
        %v490 = vunpack.c.h.b16 %v388
        %v491 = vunpack.c.l.b16 %v389
        %v492 = vunpack.c.l.b16 %v390
        %v493 = vunpack.c.h.b16 %v390
        %v494 = vunpack.c.l.b16 %v391
        %v495 = vunpack.c.l.b16 %v392
        %v496 = vunpack.c.h.b16 %v392
        %v497 = vunpack.c.l.b16 %v393
        %v498 = vunpack.c.l.b16 %v394
        %v499 = vunpack.c.h.b16 %v394
        %v500 = vunpack.c.l.b16 %v395
        %v501 = vunpack.c.l.b16 %v396
        %v502 = vunpack.c.h.b16 %v396
        %v503 = vunpack.c.l.b16 %v397
        %v504 = vunpack.c.l.b16 %v398
        %v505 = vunpack.c.h.b16 %v398
        %v506 = vunpack.c.l.b16 %v399
        %v507 = vunpack.c.l.b16 %v400
        %v508 = vunpack.c.h.b16 %v400
        %v509 = vunpack.c.l.b16 %v401
        %v510 = vunpack.c.l.b16 %v402
        %v511 = vunpack.c.h.b16 %v402
        %v512 = vunpack.c.l.b16 %v403
        %v513 = vpack.c.b16 %v468, %v465
        %v514 = vpack.c.b16 %v469, %v466
        %v515 = vpack.c.b16 %v470, %v467
        %v516 = vpack.c.b16 %v474, %v471
        %v517 = vpack.c.b16 %v475, %v472
        %v518 = vpack.c.b16 %v476, %v473
        %v519 = vpack.c.b16 %v480, %v477
        %v520 = vpack.c.b16 %v481, %v478
        %v521 = vpack.c.b16 %v482, %v479
        %v522 = vpack.c.b16 %v486, %v483
        %v523 = vpack.c.b16 %v487, %v484
        %v524 = vpack.c.b16 %v488, %v485
        %v525 = vpack.c.b16 %v492, %v489
        %v526 = vpack.c.b16 %v493, %v490
        %v527 = vpack.c.b16 %v494, %v491
        %v528 = vpack.c.b16 %v498, %v495
        %v529 = vpack.c.b16 %v499, %v496
        %v530 = vpack.c.b16 %v500, %v497
        %v531 = vpack.c.b16 %v504, %v501
        %v532 = vpack.c.b16 %v505, %v502
        %v533 = vpack.c.b16 %v506, %v503
        %v534 = vpack.c.b16 %v510, %v507
        %v535 = vpack.c.b16 %v511, %v508
        %v536 = vpack.c.b16 %v512, %v509
        %561 = vmatprep.subr.bf16.mxu0 %v514
        %562 = vmatpush1.bf16.msra.mxu0 %v513
        %563 = vmatprep.subr.bf16.mxu0 %v517
        %564 = vmatpush1.bf16.msra.mxu0 %v516
        %565 = vmatprep.subr.bf16.mxu0 %v520
        %566 = vmatpush1.bf16.msra.mxu0 %v519
        %567 = vmatprep.subr.bf16.mxu0 %v523
        %568 = vmatpush1.bf16.msra.mxu0 %v522
        %569 = vmatprep.subr.bf16.mxu0 %v526
        %570 = vmatpush1.bf16.msra.mxu0 %v525
        %571 = vmatprep.subr.bf16.mxu0 %v529
        %572 = vmatpush1.bf16.msra.mxu0 %v528
        %573 = vmatprep.subr.bf16.mxu0 %v532
        %574 = vmatpush1.bf16.msra.mxu0 %v531
        %575 = vmatprep.subr.bf16.mxu0 %v535
        %576 = vmatpush1.bf16.msra.mxu0 %v534
        %577 = vmatprep.subr.bf16.mxu0 0
        %578 = vmatpush1.bf16.msra.mxu0 0
        %579 = vmatprep.subr.bf16.mxu0 0
        %580 = vmatpush1.bf16.msra.mxu0 0
        %581 = vmatprep.subr.bf16.mxu0 0
        %582 = vmatpush1.bf16.msra.mxu0 0
        %583 = vmatprep.subr.bf16.mxu0 0
        %584 = vmatpush1.bf16.msra.mxu0 0
        %585 = vmatprep.subr.bf16.mxu0 0
        %586 = vmatpush1.bf16.msra.mxu0 0
        %587 = vmatprep.subr.bf16.mxu0 0
        %588 = vmatpush1.bf16.msra.mxu0 0
        %589 = vmatprep.subr.bf16.mxu0 0
        %590 = vmatpush1.bf16.msra.mxu0 0
        %591 = vmatprep.subr.bf16.mxu0 0
        %592 = vmatpush1.bf16.msra.mxu0 0
        %593 = vmatprep.mubr.bf16.mxu0 0
        %594 = vmatmul.mubr.bf16.gmra.mrb[0].mxu0 %v429
        %v595 = vpop.f32.mrb[0].mxu0
        %v596 = vadd.f32 %v409, %v595
        %v597 = vpop.f32.mrb[0].mxu0
        %v598 = vadd.f32 %v413, %v597
        %v599 = vpop.f32.mrb[0].mxu0
        %v600 = vadd.f32 %v409, %v599
        %v601 = vpop.f32.mrb[0].mxu0
        %v602 = vadd.f32 %v413, %v601
        %603 = vmatprep.mubr.bf16.mxu0 0
        %604 = vmatmul.mubr.bf16.gmra.mrb[0].mxu0 %v430
        %v605 = vpop.f32.mrb[0].mxu0
        %v606 = vadd.f32 %v409, %v605
        %v607 = vpop.f32.mrb[0].mxu0
        %v608 = vadd.f32 %v413, %v607
        %v609 = vpop.f32.mrb[0].mxu0
        %v610 = vadd.f32 %v409, %v609
        %v611 = vpop.f32.mrb[0].mxu0
        %v612 = vadd.f32 %v413, %v611
        %613 = vdwg.mxu0
        %614 = vmatprep.subr.bf16.mxu0 0
        %615 = vmatpush1.bf16.msra.mxu0 %v515
        %616 = vmatprep.subr.bf16.mxu0 0
        %617 = vmatpush1.bf16.msra.mxu0 %v518
        %618 = vmatprep.subr.bf16.mxu0 0
        %619 = vmatpush1.bf16.msra.mxu0 %v521
        %620 = vmatprep.subr.bf16.mxu0 0
        %621 = vmatpush1.bf16.msra.mxu0 %v524
        %622 = vmatprep.subr.bf16.mxu0 0
        %623 = vmatpush1.bf16.msra.mxu0 %v527
        %624 = vmatprep.subr.bf16.mxu0 0
        %625 = vmatpush1.bf16.msra.mxu0 %v530
        %626 = vmatprep.subr.bf16.mxu0 0
        %627 = vmatpush1.bf16.msra.mxu0 %v533
        %628 = vmatprep.subr.bf16.mxu0 0
        %629 = vmatpush1.bf16.msra.mxu0 %v536
        %630 = vmatprep.subr.bf16.mxu0 0
        %631 = vmatpush1.bf16.msra.mxu0 0
        %632 = vmatprep.subr.bf16.mxu0 0
        %633 = vmatpush1.bf16.msra.mxu0 0
        %634 = vmatprep.subr.bf16.mxu0 0
        %635 = vmatpush1.bf16.msra.mxu0 0
        %636 = vmatprep.subr.bf16.mxu0 0
        %637 = vmatpush1.bf16.msra.mxu0 0
        %638 = vmatprep.subr.bf16.mxu0 0
        %639 = vmatpush1.bf16.msra.mxu0 0
        %640 = vmatprep.subr.bf16.mxu0 0
        %641 = vmatpush1.bf16.msra.mxu0 0
        %642 = vmatprep.subr.bf16.mxu0 0
        %643 = vmatpush1.bf16.msra.mxu0 0
        %644 = vmatprep.subr.bf16.mxu0 0
        %645 = vmatpush1.bf16.msra.mxu0 0
        %646 = vmatprep.mubr.bf16.mxu0 0
        %647 = vmatmul.mubr.bf16.gmra.mrb[0].mxu0 %v429
        %v648 = vpop.f32.mrb[0].mxu0
        %v649 = vadd.f32 %v417, %v648
        %v650 = vpop.f32.mrb[0].mxu0
        %v651 = vpop.f32.mrb[0].mxu0
        %v652 = vadd.f32 %v417, %v651
        %v653 = vpop.f32.mrb[0].mxu0
        %654 = vmatprep.mubr.bf16.mxu0 0
        %655 = vmatmul.mubr.bf16.gmra.mrb[0].mxu0 %v430
        %v656 = vpop.f32.mrb[0].mxu0
        %v657 = vadd.f32 %v417, %v656
        %v658 = vpop.f32.mrb[0].mxu0
        %v659 = vpop.f32.mrb[0].mxu0
        %v660 = vadd.f32 %v417, %v659
        %v661 = vpop.f32.mrb[0].mxu0
        %662 = vdwg.mxu0
        %v663 = vmul.f32 %v649, 0.25
        %v664 = vmul.f32 %v652, 0.25
        %v665 = vmul.f32 %v657, 0.25
        %v666 = vmul.f32 %v660, 0.25
        %668 = vset.pattern.permute.xlu0 0
        %669 = vperm.xlu0 %668, %v367
        %v670 = vpop.permute.xlu0 %669
        %673 = vset.pattern.permute.xlu0 0
        %674 = vperm.xlu0 %673, %v368
        %v675 = vpop.permute.xlu0 %674
        %678 = vset.pattern.permute.xlu0 0
        %679 = vperm.xlu0 %678, %v369
        %v680 = vpop.permute.xlu0 %679
        %683 = vset.pattern.permute.xlu0 0
        %684 = vperm.xlu0 %683, %v370
        %v685 = vpop.permute.xlu0 %684
        %v687 = vadd.f32 %v663, %v670
        %v688 = vadd.f32 %v664, %v675
        %v689 = vadd.f32 %v665, %v680
        %v690 = vadd.f32 %v666, %v685
        %vm691 = vcmask 64512
        %v692 = vsel %vm691, %v687, -inf
        %v693 = vsel %vm691, %v688, -inf
        %v694 = vmax.f32 %v692, %v693
        %v695 = vrot.slane %v694, 4
        %v696 = vmax.f32 %v694, %v695
        %v697 = vrot.slane %v696, 2
        %v698 = vmax.f32 %v696, %v697
        %v699 = vrot.slane %v698, 1
        %v700 = vmax.f32 %v698, %v699
        %v701 = vsel %vm691, %v689, -inf
        %v702 = vsel %vm691, %v690, -inf
        %v703 = vmax.f32 %v701, %v702
        %v704 = vrot.slane %v703, 4
        %v705 = vmax.f32 %v703, %v704
        %v706 = vrot.slane %v705, 2
        %v707 = vmax.f32 %v705, %v706
        %v708 = vrot.slane %v707, 1
        %v709 = vmax.f32 %v707, %v708
        %v710 = vsub.f32 %v687, %v700
        %v711 = vsub.f32 %v688, %v700
        %v712 = vsub.f32 %v689, %v709
        %v713 = vsub.f32 %v690, %v709
        %v714 = vmul.f32 %v710, 1.442695
        %v715 = vpow.pop %v714
        %v716 = vmul.f32 %v711, 1.442695
        %v717 = vpow.pop %v716
        %v718 = vmul.f32 %v712, 1.442695
        %v719 = vpow.pop %v718
        %v720 = vmul.f32 %v713, 1.442695
        %v721 = vpow.pop %v720
        %v722 = vsel %vm691, %v715, 0.0
        %v723 = vsel %vm691, %v717, 0.0
        %v724 = vadd.f32 %v722, %v723
        %v725 = vrot.slane %v724, 4
        %v726 = vadd.f32 %v724, %v725
        %v727 = vrot.slane %v726, 2
        %v728 = vadd.f32 %v726, %v727
        %v729 = vrot.slane %v728, 1
        %v730 = vadd.f32 %v728, %v729
        %v731 = vsel %vm691, %v719, 0.0
        %v732 = vsel %vm691, %v721, 0.0
        %v733 = vadd.f32 %v731, %v732
        %v734 = vrot.slane %v733, 4
        %v735 = vadd.f32 %v733, %v734
        %v736 = vrot.slane %v735, 2
        %v737 = vadd.f32 %v735, %v736
        %v738 = vrot.slane %v737, 1
        %v739 = vadd.f32 %v737, %v738
        %v740 = vrcp.pop %v730
        %v741 = vrcp.pop %v739
        %v742 = vmul.f32 %v715, %v740
        %v743 = vmul.f32 %v717, %v740
        %v744 = vmul.f32 %v719, %v741
        %v745 = vmul.f32 %v721, %v741
        %v746 = vpack.c.bf16 %v743, %v742
        %v747 = vpack.c.bf16 %v745, %v744
        %v749 = vsel %vm691, %v746, 0
        %v752 = vsel %vm691, %v747, 0
        %vm754 = vcmask 1043456
        %v756 = vsel %vm754, %v371, 0
        %758 = vmatprep.subr.bf16.mxu0 0
        %759 = vmatpush1.bf16.msra.mxu0 %v756
        %760 = vmatprep.subr.bf16.mxu0 0
        %761 = vmatpush1.bf16.msra.mxu0 0
        %762 = vmatprep.subr.bf16.mxu0 0
        %763 = vmatpush1.bf16.msra.mxu0 0
        %764 = vmatprep.subr.bf16.mxu0 0
        %765 = vmatpush1.bf16.msra.mxu0 0
        %766 = vmatprep.subr.bf16.mxu0 0
        %767 = vmatpush1.bf16.msra.mxu0 0
        %768 = vmatprep.subr.bf16.mxu0 0
        %769 = vmatpush1.bf16.msra.mxu0 0
        %770 = vmatprep.subr.bf16.mxu0 0
        %771 = vmatpush1.bf16.msra.mxu0 0
        %772 = vmatprep.subr.bf16.mxu0 0
        %773 = vmatpush1.bf16.msra.mxu0 0
        %774 = vmatprep.subr.bf16.mxu0 0
        %775 = vmatpush1.bf16.msra.mxu0 0
        %776 = vmatprep.subr.bf16.mxu0 0
        %777 = vmatpush1.bf16.msra.mxu0 0
        %778 = vmatprep.subr.bf16.mxu0 0
        %779 = vmatpush1.bf16.msra.mxu0 0
        %780 = vmatprep.subr.bf16.mxu0 0
        %781 = vmatpush1.bf16.msra.mxu0 0
        %782 = vmatprep.subr.bf16.mxu0 0
        %783 = vmatpush1.bf16.msra.mxu0 0
        %784 = vmatprep.subr.bf16.mxu0 0
        %785 = vmatpush1.bf16.msra.mxu0 0
        %786 = vmatprep.subr.bf16.mxu0 0
        %787 = vmatpush1.bf16.msra.mxu0 0
        %788 = vmatprep.subr.bf16.mxu0 0
        %789 = vmatpush1.bf16.msra.mxu0 0
        %790 = vmatprep.mubr.bf16.mxu0 0
        %791 = vmatmul.mubr.bf16.gmra.mrb[0].mxu0 %v749
        %v792 = vpop.f32.mrb[0].mxu0
        %v793 = vadd.f32 0.0, %v792
        %v794 = vpop.f32.mrb[0].mxu0
        %v795 = vpop.f32.mrb[0].mxu0
        %v796 = vadd.f32 0.0, %v795
        %v797 = vpop.f32.mrb[0].mxu0
        %798 = vmatprep.mubr.bf16.mxu0 0
        %799 = vmatmul.mubr.bf16.gmra.mrb[0].mxu0 %v752
        %v800 = vpop.f32.mrb[0].mxu0
        %v801 = vadd.f32 0.0, %v800
        %v802 = vpop.f32.mrb[0].mxu0
        %v803 = vpop.f32.mrb[0].mxu0
        %v804 = vadd.f32 0.0, %v803
        %v805 = vpop.f32.mrb[0].mxu0
        %806 = vdwg.mxu0
        %v807 = vmul.f32 %v793, %v596
        %v808 = vmul.f32 %v796, %v600
        %v809 = vmul.f32 %v801, %v606
        %v810 = vmul.f32 %v804, %v610
        %v811 = vadd.f32 %v807, %v808
        %v812 = vrot.slane %v811, 4
        %v813 = vadd.f32 %v811, %v812
        %v814 = vrot.slane %v813, 2
        %v815 = vadd.f32 %v813, %v814
        %v816 = vrot.slane %v815, 1
        %v817 = vadd.f32 %v815, %v816
        %v818 = vadd.f32 %v809, %v810
        %v819 = vrot.slane %v818, 4
        %v820 = vadd.f32 %v818, %v819
        %v821 = vrot.slane %v820, 2
        %v822 = vadd.f32 %v820, %v821
        %v823 = vrot.slane %v822, 1
        %v824 = vadd.f32 %v822, %v823
        %v825 = vmul.f32 %v598, %v817
        %v826 = vmul.f32 %v602, %v817
        %v827 = vmul.f32 %v608, %v824
        %v828 = vmul.f32 %v612, %v824
        %v829 = vpack.c.bf16 %v826, %v825
        %v830 = vpack.c.bf16 %v828, %v827
        %v831 = vld [vmem:[%s5] sm:$0xf]
        %v832 = vld [vmem:[%s5 + $0x4] sm:$0xf]
        %v833 = vld [vmem:[%s5 + $0x8] sm:$0xf]
        %v834 = vld [vmem:[%s5 + $0xc] sm:$0xf]
        %v835 = vld [vmem:[%s5 + $0x10] sm:$0xf]
        %v836 = vld [vmem:[%s5 + $0x14] sm:$0xf]
        %v837 = vld [vmem:[%s5 + $0x18] sm:$0xf]
        %v838 = vld [vmem:[%s5 + $0x1c] sm:$0xf]
        %v839 = vld [vmem:[%s5 + $0x20] sm:$0xf]
        %v840 = vld [vmem:[%s5 + $0x24] sm:$0xf]
        %v841 = vld [vmem:[%s5 + $0x28] sm:$0xf]
        %v842 = vld [vmem:[%s5 + $0x2c] sm:$0xf]
        %v843 = vld [vmem:[%s5 + $0x30] sm:$0xf]
        %v844 = vld [vmem:[%s5 + $0x34] sm:$0xf]
        %v845 = vld [vmem:[%s5 + $0x38] sm:$0xf]
        %v846 = vld [vmem:[%s5 + $0x3c] sm:$0xf]
        %v847 = vld [vmem:[%s6] sm:$0x1]
        %v849 = vlaneseq
        %v850 = vshrl.u32 %v849, 7
        %v851 = vsub.s32 0, %v850
        %v852 = vrot.slane %v847, %v851
        %v870 = vunpack.c.l.b16 %v831
        %v871 = vunpack.c.l.b16 %v832
        %v872 = vunpack.c.l.b16 %v833
        %v873 = vunpack.c.l.b16 %v834
        %v874 = vunpack.c.l.b16 %v835
        %v875 = vunpack.c.l.b16 %v836
        %v876 = vunpack.c.l.b16 %v837
        %v877 = vunpack.c.l.b16 %v838
        %v878 = vunpack.c.l.b16 %v839
        %v879 = vunpack.c.l.b16 %v840
        %v880 = vunpack.c.l.b16 %v841
        %v881 = vunpack.c.l.b16 %v842
        %v882 = vunpack.c.l.b16 %v843
        %v883 = vunpack.c.l.b16 %v844
        %v884 = vunpack.c.l.b16 %v845
        %v885 = vunpack.c.l.b16 %v846
        %v886 = vpack.c.b16 %v871, %v870
        %v887 = vpack.c.b16 %v873, %v872
        %v888 = vpack.c.b16 %v875, %v874
        %v889 = vpack.c.b16 %v877, %v876
        %v890 = vpack.c.b16 %v879, %v878
        %v891 = vpack.c.b16 %v881, %v880
        %v892 = vpack.c.b16 %v883, %v882
        %v893 = vpack.c.b16 %v885, %v884
        %902 = vmatprep.subr.bf16.mxu0 0
        %903 = vmatpush1.bf16.msra.mxu0 %v886
        %904 = vmatprep.subr.bf16.mxu0 0
        %905 = vmatpush1.bf16.msra.mxu0 %v887
        %906 = vmatprep.subr.bf16.mxu0 0
        %907 = vmatpush1.bf16.msra.mxu0 %v888
        %908 = vmatprep.subr.bf16.mxu0 0
        %909 = vmatpush1.bf16.msra.mxu0 %v889
        %910 = vmatprep.subr.bf16.mxu0 0
        %911 = vmatpush1.bf16.msra.mxu0 %v890
        %912 = vmatprep.subr.bf16.mxu0 0
        %913 = vmatpush1.bf16.msra.mxu0 %v891
        %914 = vmatprep.subr.bf16.mxu0 0
        %915 = vmatpush1.bf16.msra.mxu0 %v892
        %916 = vmatprep.subr.bf16.mxu0 0
        %917 = vmatpush1.bf16.msra.mxu0 %v893
        %918 = vmatprep.subr.bf16.mxu0 0
        %919 = vmatpush1.bf16.msra.mxu0 0
        %920 = vmatprep.subr.bf16.mxu0 0
        %921 = vmatpush1.bf16.msra.mxu0 0
        %922 = vmatprep.subr.bf16.mxu0 0
        %923 = vmatpush1.bf16.msra.mxu0 0
        %924 = vmatprep.subr.bf16.mxu0 0
        %925 = vmatpush1.bf16.msra.mxu0 0
        %926 = vmatprep.subr.bf16.mxu0 0
        %927 = vmatpush1.bf16.msra.mxu0 0
        %928 = vmatprep.subr.bf16.mxu0 0
        %929 = vmatpush1.bf16.msra.mxu0 0
        %930 = vmatprep.subr.bf16.mxu0 0
        %931 = vmatpush1.bf16.msra.mxu0 0
        %932 = vmatprep.subr.bf16.mxu0 0
        %933 = vmatpush1.bf16.msra.mxu0 0
        %934 = vmatprep.mubr.bf16.mxu0 0
        %935 = vmatmul.mubr.bf16.gmra.mrb[0].mxu0 %v829
        %v936 = vpop.f32.mrb[0].mxu0
        %v937 = vadd.f32 %v852, %v936
        %v938 = vpop.f32.mrb[0].mxu0
        %v939 = vpop.f32.mrb[0].mxu0
        %v940 = vadd.f32 %v852, %v939
        %v941 = vpop.f32.mrb[0].mxu0
        %942 = vmatprep.mubr.bf16.mxu0 0
        %943 = vmatmul.mubr.bf16.gmra.mrb[0].mxu0 %v830
        %v944 = vpop.f32.mrb[0].mxu0
        %v945 = vadd.f32 %v852, %v944
        %v946 = vpop.f32.mrb[0].mxu0
        %v947 = vpop.f32.mrb[0].mxu0
        %v948 = vadd.f32 %v852, %v947
        %v949 = vpop.f32.mrb[0].mxu0
        %950 = vdwg.mxu0
        %v951 = vmul.f32 %v937, 0.25
        %v952 = vmul.f32 %v940, 0.25
        %v953 = vmul.f32 %v945, 0.25
        %v954 = vmul.f32 %v948, 0.25
        %v955 = vadd.f32 %v951, %v670
        %v956 = vadd.f32 %v952, %v675
        %v957 = vadd.f32 %v953, %v680
        %v958 = vadd.f32 %v954, %v685
        %v959 = vsel %vm691, %v955, -inf
        %v960 = vsel %vm691, %v956, -inf
        %v961 = vmax.f32 %v959, %v960
        %v962 = vrot.slane %v961, 4
        %v963 = vmax.f32 %v961, %v962
        %v964 = vrot.slane %v963, 2
        %v965 = vmax.f32 %v963, %v964
        %v966 = vrot.slane %v965, 1
        %v967 = vmax.f32 %v965, %v966
        %v968 = vsel %vm691, %v957, -inf
        %v969 = vsel %vm691, %v958, -inf
        %v970 = vmax.f32 %v968, %v969
        %v971 = vrot.slane %v970, 4
        %v972 = vmax.f32 %v970, %v971
        %v973 = vrot.slane %v972, 2
        %v974 = vmax.f32 %v972, %v973
        %v975 = vrot.slane %v974, 1
        %v976 = vmax.f32 %v974, %v975
        %v977 = vsub.f32 %v955, %v967
        %v978 = vsub.f32 %v956, %v967
        %v979 = vsub.f32 %v957, %v976
        %v980 = vsub.f32 %v958, %v976
        %v981 = vmul.f32 %v977, 1.442695
        %v982 = vpow.pop %v981
        %v983 = vmul.f32 %v978, 1.442695
        %v984 = vpow.pop %v983
        %v985 = vmul.f32 %v979, 1.442695
        %v986 = vpow.pop %v985
        %v987 = vmul.f32 %v980, 1.442695
        %v988 = vpow.pop %v987
        %v989 = vsel %vm691, %v982, 0.0
        %v990 = vsel %vm691, %v984, 0.0
        %v991 = vadd.f32 %v989, %v990
        %v992 = vrot.slane %v991, 4
        %v993 = vadd.f32 %v991, %v992
        %v994 = vrot.slane %v993, 2
        %v995 = vadd.f32 %v993, %v994
        %v996 = vrot.slane %v995, 1
        %v997 = vadd.f32 %v995, %v996
        %v998 = vsel %vm691, %v986, 0.0
        %v999 = vsel %vm691, %v988, 0.0
        %v1000 = vadd.f32 %v998, %v999
        %v1001 = vrot.slane %v1000, 4
        %v1002 = vadd.f32 %v1000, %v1001
        %v1003 = vrot.slane %v1002, 2
        %v1004 = vadd.f32 %v1002, %v1003
        %v1005 = vrot.slane %v1004, 1
        %v1006 = vadd.f32 %v1004, %v1005
        %v1007 = vrcp.pop %v997
        %v1008 = vrcp.pop %v1006
        %v1009 = vmul.f32 %v982, %v1007
        %v1010 = vmul.f32 %v984, %v1007
        %v1011 = vmul.f32 %v986, %v1008
        %v1012 = vmul.f32 %v988, %v1008
        %v1013 = vpack.c.bf16 %v1010, %v1009
        %v1014 = vpack.c.bf16 %v1012, %v1011
        %v1016 = vsel %vm691, %v1013, 0
        %v1019 = vsel %vm691, %v1014, 0
        %1021 = vmatprep.subr.bf16.mxu0 0
        %1022 = vmatpush1.bf16.msra.mxu0 %v756
        %1023 = vmatprep.subr.bf16.mxu0 0
        %1024 = vmatpush1.bf16.msra.mxu0 0
        %1025 = vmatprep.subr.bf16.mxu0 0
        %1026 = vmatpush1.bf16.msra.mxu0 0
        %1027 = vmatprep.subr.bf16.mxu0 0
        %1028 = vmatpush1.bf16.msra.mxu0 0
        %1029 = vmatprep.subr.bf16.mxu0 0
        %1030 = vmatpush1.bf16.msra.mxu0 0
        %1031 = vmatprep.subr.bf16.mxu0 0
        %1032 = vmatpush1.bf16.msra.mxu0 0
        %1033 = vmatprep.subr.bf16.mxu0 0
        %1034 = vmatpush1.bf16.msra.mxu0 0
        %1035 = vmatprep.subr.bf16.mxu0 0
        %1036 = vmatpush1.bf16.msra.mxu0 0
        %1037 = vmatprep.subr.bf16.mxu0 0
        %1038 = vmatpush1.bf16.msra.mxu0 0
        %1039 = vmatprep.subr.bf16.mxu0 0
        %1040 = vmatpush1.bf16.msra.mxu0 0
        %1041 = vmatprep.subr.bf16.mxu0 0
        %1042 = vmatpush1.bf16.msra.mxu0 0
        %1043 = vmatprep.subr.bf16.mxu0 0
        %1044 = vmatpush1.bf16.msra.mxu0 0
        %1045 = vmatprep.subr.bf16.mxu0 0
        %1046 = vmatpush1.bf16.msra.mxu0 0
        %1047 = vmatprep.subr.bf16.mxu0 0
        %1048 = vmatpush1.bf16.msra.mxu0 0
        %1049 = vmatprep.subr.bf16.mxu0 0
        %1050 = vmatpush1.bf16.msra.mxu0 0
        %1051 = vmatprep.subr.bf16.mxu0 0
        %1052 = vmatpush1.bf16.msra.mxu0 0
        %1053 = vmatprep.mubr.bf16.mxu0 0
        %1054 = vmatmul.mubr.bf16.gmra.mrb[0].mxu0 %v1016
        %v1055 = vpop.f32.mrb[0].mxu0
        %v1056 = vadd.f32 0.0, %v1055
        %v1057 = vpop.f32.mrb[0].mxu0
        %v1058 = vpop.f32.mrb[0].mxu0
        %v1059 = vadd.f32 0.0, %v1058
        %v1060 = vpop.f32.mrb[0].mxu0
        %1061 = vmatprep.mubr.bf16.mxu0 0
        %1062 = vmatmul.mubr.bf16.gmra.mrb[0].mxu0 %v1019
        %v1063 = vpop.f32.mrb[0].mxu0
        %v1064 = vadd.f32 0.0, %v1063
        %v1065 = vpop.f32.mrb[0].mxu0
        %v1066 = vpop.f32.mrb[0].mxu0
        %v1067 = vadd.f32 0.0, %v1066
        %v1068 = vpop.f32.mrb[0].mxu0
        %1069 = vdwg.mxu0
        %v1070 = vmul.f32 %v1056, %v825
        %v1071 = vmul.f32 %v1059, %v826
        %v1072 = vmul.f32 %v1064, %v827
        %v1073 = vmul.f32 %v1067, %v828
        %v1074 = vadd.f32 %v1070, %v1071
        %v1075 = vrot.slane %v1074, 4
        %v1076 = vadd.f32 %v1074, %v1075
        %v1077 = vrot.slane %v1076, 2
        %v1078 = vadd.f32 %v1076, %v1077
        %v1079 = vrot.slane %v1078, 1
        %v1080 = vadd.f32 %v1078, %v1079
        %v1081 = vadd.f32 %v1072, %v1073
        %v1082 = vrot.slane %v1081, 4
        %v1083 = vadd.f32 %v1081, %v1082
        %v1084 = vrot.slane %v1083, 2
        %v1085 = vadd.f32 %v1083, %v1084
        %v1086 = vrot.slane %v1085, 1
        %v1087 = vadd.f32 %v1085, %v1086
        %v1088 = vmul.f32 %v1080, %v596
        %v1089 = vmul.f32 %v1080, %v600
        %v1090 = vmul.f32 %v1087, %v606
        %v1091 = vmul.f32 %v1087, %v610
        %v1092 = vpack.c.bf16 %v1089, %v1088
        %v1093 = vpack.c.bf16 %v1091, %v1090
        %v1094 = vld [vmem:[%s7] sm:$0xf]
        %v1095 = vld [vmem:[%s7 + $0x4] sm:$0xf]
        %v1096 = vld [vmem:[%s7 + $0x8] sm:$0xf]
        %v1097 = vld [vmem:[%s7 + $0xc] sm:$0xf]
        %v1098 = vld [vmem:[%s7 + $0x10] sm:$0xf]
        %v1099 = vld [vmem:[%s7 + $0x14] sm:$0xf]
        %v1100 = vld [vmem:[%s7 + $0x18] sm:$0xf]
        %v1101 = vld [vmem:[%s7 + $0x1c] sm:$0xf]
        %v1102 = vld [vmem:[%s7 + $0x20] sm:$0xf]
        %v1103 = vld [vmem:[%s7 + $0x24] sm:$0xf]
        %v1104 = vld [vmem:[%s7 + $0x28] sm:$0xf]
        %v1105 = vld [vmem:[%s7 + $0x2c] sm:$0xf]
        %v1106 = vld [vmem:[%s7 + $0x30] sm:$0xf]
        %v1107 = vld [vmem:[%s7 + $0x34] sm:$0xf]
        %v1108 = vld [vmem:[%s7 + $0x38] sm:$0xf]
        %v1109 = vld [vmem:[%s7 + $0x3c] sm:$0xf]
        %v1110 = vld [vmem:[%s8] sm:$0x1]
        %v1112 = vlaneseq
        %v1113 = vshrl.u32 %v1112, 7
        %v1114 = vsub.s32 0, %v1113
        %v1115 = vrot.slane %v1110, %v1114
        %v1133 = vunpack.c.l.b16 %v1094
        %v1134 = vunpack.c.l.b16 %v1095
        %v1135 = vunpack.c.l.b16 %v1096
        %v1136 = vunpack.c.l.b16 %v1097
        %v1137 = vunpack.c.l.b16 %v1098
        %v1138 = vunpack.c.l.b16 %v1099
        %v1139 = vunpack.c.l.b16 %v1100
        %v1140 = vunpack.c.l.b16 %v1101
        %v1141 = vunpack.c.l.b16 %v1102
        %v1142 = vunpack.c.l.b16 %v1103
        %v1143 = vunpack.c.l.b16 %v1104
        %v1144 = vunpack.c.l.b16 %v1105
        %v1145 = vunpack.c.l.b16 %v1106
        %v1146 = vunpack.c.l.b16 %v1107
        %v1147 = vunpack.c.l.b16 %v1108
        %v1148 = vunpack.c.l.b16 %v1109
        %v1149 = vpack.c.b16 %v1134, %v1133
        %v1150 = vpack.c.b16 %v1136, %v1135
        %v1151 = vpack.c.b16 %v1138, %v1137
        %v1152 = vpack.c.b16 %v1140, %v1139
        %v1153 = vpack.c.b16 %v1142, %v1141
        %v1154 = vpack.c.b16 %v1144, %v1143
        %v1155 = vpack.c.b16 %v1146, %v1145
        %v1156 = vpack.c.b16 %v1148, %v1147
        %1165 = vmatprep.subr.bf16.mxu0 0
        %1166 = vmatpush1.bf16.msra.mxu0 %v1149
        %1167 = vmatprep.subr.bf16.mxu0 0
        %1168 = vmatpush1.bf16.msra.mxu0 %v1150
        %1169 = vmatprep.subr.bf16.mxu0 0
        %1170 = vmatpush1.bf16.msra.mxu0 %v1151
        %1171 = vmatprep.subr.bf16.mxu0 0
        %1172 = vmatpush1.bf16.msra.mxu0 %v1152
        %1173 = vmatprep.subr.bf16.mxu0 0
        %1174 = vmatpush1.bf16.msra.mxu0 %v1153
        %1175 = vmatprep.subr.bf16.mxu0 0
        %1176 = vmatpush1.bf16.msra.mxu0 %v1154
        %1177 = vmatprep.subr.bf16.mxu0 0
        %1178 = vmatpush1.bf16.msra.mxu0 %v1155
        %1179 = vmatprep.subr.bf16.mxu0 0
        %1180 = vmatpush1.bf16.msra.mxu0 %v1156
        %1181 = vmatprep.subr.bf16.mxu0 0
        %1182 = vmatpush1.bf16.msra.mxu0 0
        %1183 = vmatprep.subr.bf16.mxu0 0
        %1184 = vmatpush1.bf16.msra.mxu0 0
        %1185 = vmatprep.subr.bf16.mxu0 0
        %1186 = vmatpush1.bf16.msra.mxu0 0
        %1187 = vmatprep.subr.bf16.mxu0 0
        %1188 = vmatpush1.bf16.msra.mxu0 0
        %1189 = vmatprep.subr.bf16.mxu0 0
        %1190 = vmatpush1.bf16.msra.mxu0 0
        %1191 = vmatprep.subr.bf16.mxu0 0
        %1192 = vmatpush1.bf16.msra.mxu0 0
        %1193 = vmatprep.subr.bf16.mxu0 0
        %1194 = vmatpush1.bf16.msra.mxu0 0
        %1195 = vmatprep.subr.bf16.mxu0 0
        %1196 = vmatpush1.bf16.msra.mxu0 0
        %1197 = vmatprep.mubr.bf16.mxu0 0
        %1198 = vmatmul.mubr.bf16.gmra.mrb[0].mxu0 %v1092
        %v1199 = vpop.f32.mrb[0].mxu0
        %v1200 = vadd.f32 %v1115, %v1199
        %v1201 = vpop.f32.mrb[0].mxu0
        %v1202 = vpop.f32.mrb[0].mxu0
        %v1203 = vadd.f32 %v1115, %v1202
        %v1204 = vpop.f32.mrb[0].mxu0
        %1205 = vmatprep.mubr.bf16.mxu0 0
        %1206 = vmatmul.mubr.bf16.gmra.mrb[0].mxu0 %v1093
        %v1207 = vpop.f32.mrb[0].mxu0
        %v1208 = vadd.f32 %v1115, %v1207
        %v1209 = vpop.f32.mrb[0].mxu0
        %v1210 = vpop.f32.mrb[0].mxu0
        %v1211 = vadd.f32 %v1115, %v1210
        %v1212 = vpop.f32.mrb[0].mxu0
        %1213 = vdwg.mxu0
        %v1214 = vadd.f32 %v1200, %v596
        %v1215 = vadd.f32 %v1203, %v600
        %v1216 = vadd.f32 %v1208, %v606
        %v1217 = vadd.f32 %v1211, %v610
        %1218 = vst [vmem:[%s346] sm:$0xff] %v1214
        %1219 = vst [vmem:[%s346 + $0x8] sm:$0xff] %v1215
        %1220 = vst [vmem:[%s346 + $0x10] sm:$0xff] %v1216
        %1221 = vst [vmem:[%s346 + $0x18] sm:$0xff] %v1217
        %s1222 = sand.u32 %s230, 1
        %s1223 = scalar_lea.sflag [#allocation3], %s1222
        %s1224 = sand.u32 %s230, 1
        %s1225 = smul.addr %s1224, 32
        %s1226 = scalar_lea.vmem [#allocation2], %s1225
        // Predicated region
        $region57: #{tpu_custom_call.1} parent=55 // pred_check
          %p1227 = pneg %p240
        $region58: #{tpu_custom_call.1} parent=55 // pred_check_branch
          %1229 = sbr.rel (%p1227) target = $region60
        $region59: #{tpu_custom_call.1} parent=55 // pred_region
          %s1230 = smul.u32 2, %s23
          %s1232 = ssub.s32 512, 512
          %1233 = vsyncadd %s1223, %s1232
          %s1234 = smul.addr %s1230, 2
          %s1235 = smul.addr %s1234, 128
          %s1236 = scalar_lea.hbm %s9, %s1235
          %s1237 = sshll.u32 %s1226, 4
          %s1238 = int_to_ptr.vmem [resolvable:$true] %s1237
          %1243 = dma.vmem_to_hbm [thread:$0]  %s1238, 512, %s1236, %s1223, 128, 128, 8
        $region60: #{tpu_custom_call.1} parent=55 // pred_fallthru
          _
      $region56: #{tpu_custom_call.1} parent=5 // pred_fallthru
        _
      %p1244 = scmp.le.s32.totalorder 2, %s18
      // Predicated region
      $region61: #{tpu_custom_call.1} parent=5 // pred_check
        %p1245 = pneg %p1244
      $region62: #{tpu_custom_call.1} parent=5 // pred_check_branch
        %1247 = sbr.rel (%p1245) target = $region64
      $region63: #{tpu_custom_call.1} parent=5 // pred_region
        %s1248 = ssub.s32 %s18, 2
        // Predicated region
        $region65: #{tpu_custom_call.1} parent=63 // pred_check
          %p1249 = pneg %p246
        $region66: #{tpu_custom_call.1} parent=63 // pred_check_branch
          %1251 = sbr.rel (%p1249) target = $region68
        $region67: #{tpu_custom_call.1} parent=63 // pred_region
          %s1252 = sand.u32 %s231, 1
          %s1253 = scalar_lea.sflag [#allocation3], %s1252
          %s1254 = sand.u32 %s231, 1
          %s1255 = smul.addr %s1254, 32
          %s1256 = scalar_lea.vmem [#allocation2], %s1255
          %1257 = dma.done %s1253, 512
        $region68: #{tpu_custom_call.1} parent=63 // pred_fallthru
          _
      $region64: #{tpu_custom_call.1} parent=5 // pred_fallthru
        _
    $region6: #{tpu_custom_call.1} parent=1 // loop_footer
      %s22 = sadd.s32 1, %s18
    $region7: #{tpu_custom_call.1} parent=1 // loop_footer_branch
      %17 = sbr.rel target = $region3
    $region8: #{tpu_custom_call.1} parent=1 // loop_exit
      _
    %1258 = vsyncpa [#allocation3], 1
    %s1259 = scalar_lea.sflag [#allocation3], 1
    %1260 = vsyncpa %s1259, 1

// kernel: tpu_custom_call.1
$region0: #{tpu_custom_call.1}
  #allocation0 [shape = 'u32[]', space=smem, size = 0x4, offset = 0x4, fixed_abs, tag = 'smem constant byte address 0x4 - core index']
  #allocation1 [shape = 'u32[144,128]{1,0:T(1,128)}', space=vmem, size = 0x12000, scoped, tag = 'internal scratch']
  %s0 = inlined_call_operand.vmem [shape: bf16[4,16,128], index: 0, kind: input, shape index: {}]
  %s1 = inlined_call_operand.vmem [shape: f32[4,16,1], index: 1, kind: input, shape index: {}]
  %s2 = inlined_call_operand.vmem [shape: bf16[8,128], index: 2, kind: input, shape index: {}]
  %s3 = inlined_call_operand.vmem [shape: bf16[128,264], index: 3, kind: input, shape index: {}]
  %s4 = inlined_call_operand.vmem [shape: f32[1,264], index: 4, kind: input, shape index: {}]
  %s5 = inlined_call_operand.vmem [shape: bf16[128,8], index: 5, kind: input, shape index: {}]
  %s6 = inlined_call_operand.vmem [shape: f32[1,8], index: 6, kind: input, shape index: {}]
  %s7 = inlined_call_operand.vmem [shape: bf16[128,128], index: 7, kind: input, shape index: {}]
  %s8 = inlined_call_operand.vmem [shape: f32[1,128], index: 8, kind: input, shape index: {}]
  %s9 = inlined_call_operand.hbm [shape: f32[4,16,128], index: 9, kind: output, shape index: {}]
  %s10 = sld [smem:[#allocation0]]
  $region69: #{tpu_custom_call.1} parent=0
    _
  %s12 = ssub.s32 1, %s10
  %s13 = scalar_select 0, %s12, %s10
  $region1: #{tpu_custom_call.1} parent=0
    #allocation2 [shape = 'u8[32768]{0}', space=vmem, size = 0x8000, scoped, tag = 'output window, operand 0']
    #allocation3 [shape = 's32[2]{0}', space=sflag, size = 0x8, scoped, tag = 'scoped memory for tpu_custom_call.1']
    %14 = vsyncpa [#allocation3], 0
    %s15 = scalar_lea.sflag [#allocation3], 1
    %16 = vsyncpa %s15, 0
    loop: start=0, step=1, limit=4
    $region2: #{tpu_custom_call.1} parent=1 // loop_pre_header
      _
    $region3: #{tpu_custom_call.1} parent=1 // loop_header
      %s18 = sphi 0, %s22
      %p19 = scmp.ge.s32.totalorder %s18, 4
      %s28 = sphi 0, %s30
      %s31 = sphi 0, %s28
      %s32 = sphi 0, %s31
      %s48 = sphi 0, %s32
      %s54 = sphi 0, %s56
      %s57 = sphi 0, %s54
      %s58 = sphi 0, %s57
      %s74 = sphi 0, %s58
      %s78 = sphi 0, %s78
      %s80 = sphi 0, %s78
      %s81 = sphi 0, %s80
      %s95 = sphi 0, %s81
      %s99 = sphi 0, %s99
      %s101 = sphi 0, %s99
      %s102 = sphi 0, %s101
      %s116 = sphi 0, %s102
      %s120 = sphi 0, %s120
      %s122 = sphi 0, %s120
      %s123 = sphi 0, %s122
      %s137 = sphi 0, %s123
      %s141 = sphi 0, %s141
      %s143 = sphi 0, %s141
      %s144 = sphi 0, %s143
      %s158 = sphi 0, %s144
      %s162 = sphi 0, %s162
      %s164 = sphi 0, %s162
      %s165 = sphi 0, %s164
      %s179 = sphi 0, %s165
      %s183 = sphi 0, %s183
      %s185 = sphi 0, %s183
      %s186 = sphi 0, %s185
      %s200 = sphi 0, %s186
      %s204 = sphi 0, %s204
      %s206 = sphi 0, %s204
      %s207 = sphi 0, %s206
      %s221 = sphi 0, %s207
      %s227 = sphi 0, %s229
      %s230 = sphi 0, %s227
      %s231 = sphi 0, %s230
      %s247 = sphi 0, %s231
    $region4: #{tpu_custom_call.1} parent=1 // loop_header_branch
      %21 = sbr.rel (%p19) target = $region8
    $region5: #{tpu_custom_call.1} parent=1 // loop_body
      %s23 = ssub.s32 %s18, 1
      %s24 = ssub.s32 %s18, 2
      %s25 = sadd.s32 %s18, 1
      %s26 = ssub.s32 %s18, %s25
      %p27 = scmp.eq.s32.totalorder %s26, 0
      %s29 = sadd.s32 %s28, 1
      %s30 = scalar_select %p27, %s28, %s29
      %p33 = pneg %p27
      %p34 = scmp.eq.s32.totalorder %s18, 1
      %p35 = por %p33, %p34
      %p36 = scmp.ne.s32.totalorder %s28, %s31
      %p37 = scmp.eq.s32.totalorder %s18, 0
      %p38 = por %p36, %p37
      %p39 = scmp.ne.s32.totalorder %s28, %s31
      %p40 = scmp.eq.s32.totalorder %s23, 1
      %p41 = por %p39, %p40
      %p42 = scmp.ne.s32.totalorder %s31, %s32
      %p43 = scmp.eq.s32.totalorder %s23, 0
      %p44 = por %p42, %p43
      %p45 = scmp.ne.s32.totalorder %s31, %s32
      %p46 = scmp.eq.s32.totalorder %s24, 1
      %p47 = por %p45, %p46
      %p49 = scmp.ne.s32.totalorder %s32, %s48
      %p50 = scmp.eq.s32.totalorder %s24, 0
      %p51 = por %p49, %p50
      %s52 = ssub.s32 %s18, %s25
      %p53 = scmp.eq.s32.totalorder %s52, 0
      %s55 = sadd.s32 %s54, 1
      %s56 = scalar_select %p53, %s54, %s55
      %p59 = pneg %p53
      %p60 = scmp.eq.s32.totalorder %s18, 1
      %p61 = por %p59, %p60
      %p62 = scmp.ne.s32.totalorder %s54, %s57
      %p63 = scmp.eq.s32.totalorder %s18, 0
      %p64 = por %p62, %p63
      %p65 = scmp.ne.s32.totalorder %s54, %s57
      %p66 = scmp.eq.s32.totalorder %s23, 1
      %p67 = por %p65, %p66
      %p68 = scmp.ne.s32.totalorder %s57, %s58
      %p69 = scmp.eq.s32.totalorder %s23, 0
      %p70 = por %p68, %p69
      %p71 = scmp.ne.s32.totalorder %s57, %s58
      %p72 = scmp.eq.s32.totalorder %s24, 1
      %p73 = por %p71, %p72
      %p75 = scmp.ne.s32.totalorder %s58, %s74
      %p76 = scmp.eq.s32.totalorder %s24, 0
      %p77 = por %p75, %p76
      %s79 = sadd.s32 %s78, 1
      %p82 = scmp.eq.s32.totalorder %s18, 1
      %p83 = scmp.ne.s32.totalorder %s78, %s80
      %p84 = scmp.eq.s32.totalorder %s18, 0
      %p85 = por %p83, %p84
      %p86 = scmp.ne.s32.totalorder %s78, %s80
      %p87 = scmp.eq.s32.totalorder %s23, 1
      %p88 = por %p86, %p87
      %p89 = scmp.ne.s32.totalorder %s80, %s81
      %p90 = scmp.eq.s32.totalorder %s23, 0
      %p91 = por %p89, %p90
      %p92 = scmp.ne.s32.totalorder %s80, %s81
      %p93 = scmp.eq.s32.totalorder %s24, 1
      %p94 = por %p92, %p93
      %p96 = scmp.ne.s32.totalorder %s81, %s95
      %p97 = scmp.eq.s32.totalorder %s24, 0
      %p98 = por %p96, %p97
      %s100 = sadd.s32 %s99, 1
      %p103 = scmp.eq.s32.totalorder %s18, 1
      %p104 = scmp.ne.s32.totalorder %s99, %s101
      %p105 = scmp.eq.s32.totalorder %s18, 0
      %p106 = por %p104, %p105
      %p107 = scmp.ne.s32.totalorder %s99, %s101
      %p108 = scmp.eq.s32.totalorder %s23, 1
      %p109 = por %p107, %p108
      %p110 = scmp.ne.s32.totalorder %s101, %s102
      %p111 = scmp.eq.s32.totalorder %s23, 0
      %p112 = por %p110, %p111
      %p113 = scmp.ne.s32.totalorder %s101, %s102
      %p114 = scmp.eq.s32.totalorder %s24, 1
      %p115 = por %p113, %p114
      %p117 = scmp.ne.s32.totalorder %s102, %s116
      %p118 = scmp.eq.s32.totalorder %s24, 0
      %p119 = por %p117, %p118
      %s121 = sadd.s32 %s120, 1
      %p124 = scmp.eq.s32.totalorder %s18, 1
      %p125 = scmp.ne.s32.totalorder %s120, %s122
      %p126 = scmp.eq.s32.totalorder %s18, 0
      %p127 = por %p125, %p126
      %p128 = scmp.ne.s32.totalorder %s120, %s122
      %p129 = scmp.eq.s32.totalorder %s23, 1
      %p130 = por %p128, %p129
      %p131 = scmp.ne.s32.totalorder %s122, %s123
      %p132 = scmp.eq.s32.totalorder %s23, 0
      %p133 = por %p131, %p132
      %p134 = scmp.ne.s32.totalorder %s122, %s123
      %p135 = scmp.eq.s32.totalorder %s24, 1
      %p136 = por %p134, %p135
      %p138 = scmp.ne.s32.totalorder %s123, %s137
      %p139 = scmp.eq.s32.totalorder %s24, 0
      %p140 = por %p138, %p139
      %s142 = sadd.s32 %s141, 1
      %p145 = scmp.eq.s32.totalorder %s18, 1
      %p146 = scmp.ne.s32.totalorder %s141, %s143
      %p147 = scmp.eq.s32.totalorder %s18, 0
      %p148 = por %p146, %p147
      %p149 = scmp.ne.s32.totalorder %s141, %s143
      %p150 = scmp.eq.s32.totalorder %s23, 1
      %p151 = por %p149, %p150
      %p152 = scmp.ne.s32.totalorder %s143, %s144
      %p153 = scmp.eq.s32.totalorder %s23, 0
      %p154 = por %p152, %p153
      %p155 = scmp.ne.s32.totalorder %s143, %s144
      %p156 = scmp.eq.s32.totalorder %s24, 1
      %p157 = por %p155, %p156
      %p159 = scmp.ne.s32.totalorder %s144, %s158
      %p160 = scmp.eq.s32.totalorder %s24, 0
      %p161 = por %p159, %p160
      %s163 = sadd.s32 %s162, 1
      %p166 = scmp.eq.s32.totalorder %s18, 1
      %p167 = scmp.ne.s32.totalorder %s162, %s164
      %p168 = scmp.eq.s32.totalorder %s18, 0
      %p169 = por %p167, %p168
      %p170 = scmp.ne.s32.totalorder %s162, %s164
      %p171 = scmp.eq.s32.totalorder %s23, 1
      %p172 = por %p170, %p171
      %p173 = scmp.ne.s32.totalorder %s164, %s165
      %p174 = scmp.eq.s32.totalorder %s23, 0
      %p175 = por %p173, %p174
      %p176 = scmp.ne.s32.totalorder %s164, %s165
      %p177 = scmp.eq.s32.totalorder %s24, 1
      %p178 = por %p176, %p177
      %p180 = scmp.ne.s32.totalorder %s165, %s179
      %p181 = scmp.eq.s32.totalorder %s24, 0
      %p182 = por %p180, %p181
      %s184 = sadd.s32 %s183, 1
      %p187 = scmp.eq.s32.totalorder %s18, 1
      %p188 = scmp.ne.s32.totalorder %s183, %s185
      %p189 = scmp.eq.s32.totalorder %s18, 0
      %p190 = por %p188, %p189
      %p191 = scmp.ne.s32.totalorder %s183, %s185
      %p192 = scmp.eq.s32.totalorder %s23, 1
      %p193 = por %p191, %p192
      %p194 = scmp.ne.s32.totalorder %s185, %s186
      %p195 = scmp.eq.s32.totalorder %s23, 0
      %p196 = por %p194, %p195
      %p197 = scmp.ne.s32.totalorder %s185, %s186
      %p198 = scmp.eq.s32.totalorder %s24, 1
      %p199 = por %p197, %p198
      %p201 = scmp.ne.s32.totalorder %s186, %s200
      %p202 = scmp.eq.s32.totalorder %s24, 0
      %p203 = por %p201, %p202
      %s205 = sadd.s32 %s204, 1
      %p208 = scmp.eq.s32.totalorder %s18, 1
      %p209 = scmp.ne.s32.totalorder %s204, %s206
      %p210 = scmp.eq.s32.totalorder %s18, 0
      %p211 = por %p209, %p210
      %p212 = scmp.ne.s32.totalorder %s204, %s206
      %p213 = scmp.eq.s32.totalorder %s23, 1
      %p214 = por %p212, %p213
      %p215 = scmp.ne.s32.totalorder %s206, %s207
      %p216 = scmp.eq.s32.totalorder %s23, 0
      %p217 = por %p215, %p216
      %p218 = scmp.ne.s32.totalorder %s206, %s207
      %p219 = scmp.eq.s32.totalorder %s24, 1
      %p220 = por %p218, %p219
      %p222 = scmp.ne.s32.totalorder %s207, %s221
      %p223 = scmp.eq.s32.totalorder %s24, 0
      %p224 = por %p222, %p223
      %s225 = ssub.s32 %s18, %s25
      %p226 = scmp.eq.s32.totalorder %s225, 0
      %s228 = sadd.s32 %s227, 1
      %s229 = scalar_select %p226, %s227, %s228
      %p232 = pneg %p226
      %p233 = scmp.eq.s32.totalorder %s18, 1
      %p234 = por %p232, %p233
      %p235 = scmp.ne.s32.totalorder %s227, %s230
      %p236 = scmp.eq.s32.totalorder %s18, 0
      %p237 = por %p235, %p236
      %p238 = scmp.ne.s32.totalorder %s227, %s230
      %p239 = scmp.eq.s32.totalorder %s23, 1
      %p240 = por %p238, %p239
      %p241 = scmp.ne.s32.totalorder %s230, %s231
      %p242 = scmp.eq.s32.totalorder %s23, 0
      %p243 = por %p241, %p242
      %p244 = scmp.ne.s32.totalorder %s230, %s231
      %p245 = scmp.eq.s32.totalorder %s24, 1
      %p246 = por %p244, %p245
      %p248 = scmp.ne.s32.totalorder %s231, %s247
      %p249 = scmp.eq.s32.totalorder %s24, 0
      %p250 = por %p248, %p249
      %p251 = scmp.le.s32.totalorder 1, %s18
      %p252 = scmp.lt.s32.totalorder %s18, 3
      %p253 = pnand %p251, %p252
      %p254 = pneg %p253
      // Predicated region
      $region9: #{tpu_custom_call.1} parent=5 // pred_check
        _
      $region10: #{tpu_custom_call.1} parent=5 // pred_check_branch
        %256 = sbr.rel (%p253) target = $region12
      $region11: #{tpu_custom_call.1} parent=5 // pred_region
        %s257 = ssub.s32 %s18, 1
        // Predicated region
        $region13: #{tpu_custom_call.1} parent=11 // pred_check
          %p258 = pneg %p91
        $region14: #{tpu_custom_call.1} parent=11 // pred_check_branch
          %260 = sbr.rel (%p258) target = $region16
        $region15: #{tpu_custom_call.1} parent=11 // pred_region
          _
        $region16: #{tpu_custom_call.1} parent=11 // pred_fallthru
          _
        // Predicated region
        $region17: #{tpu_custom_call.1} parent=11 // pred_check
          %p261 = pneg %p112
        $region18: #{tpu_custom_call.1} parent=11 // pred_check_branch
          %263 = sbr.rel (%p261) target = $region20
        $region19: #{tpu_custom_call.1} parent=11 // pred_region
          _
        $region20: #{tpu_custom_call.1} parent=11 // pred_fallthru
          _
        // Predicated region
        $region21: #{tpu_custom_call.1} parent=11 // pred_check
          %p264 = pneg %p133
        $region22: #{tpu_custom_call.1} parent=11 // pred_check_branch
          %266 = sbr.rel (%p264) target = $region24
        $region23: #{tpu_custom_call.1} parent=11 // pred_region
          _
        $region24: #{tpu_custom_call.1} parent=11 // pred_fallthru
          _
        // Predicated region
        $region25: #{tpu_custom_call.1} parent=11 // pred_check
          %p267 = pneg %p154
        $region26: #{tpu_custom_call.1} parent=11 // pred_check_branch
          %269 = sbr.rel (%p267) target = $region28
        $region27: #{tpu_custom_call.1} parent=11 // pred_region
          _
        $region28: #{tpu_custom_call.1} parent=11 // pred_fallthru
          _
        // Predicated region
        $region29: #{tpu_custom_call.1} parent=11 // pred_check
          %p270 = pneg %p175
        $region30: #{tpu_custom_call.1} parent=11 // pred_check_branch
          %272 = sbr.rel (%p270) target = $region32
        $region31: #{tpu_custom_call.1} parent=11 // pred_region
          _
        $region32: #{tpu_custom_call.1} parent=11 // pred_fallthru
          _
        // Predicated region
        $region33: #{tpu_custom_call.1} parent=11 // pred_check
          %p273 = pneg %p196
        $region34: #{tpu_custom_call.1} parent=11 // pred_check_branch
          %275 = sbr.rel (%p273) target = $region36
        $region35: #{tpu_custom_call.1} parent=11 // pred_region
          _
        $region36: #{tpu_custom_call.1} parent=11 // pred_fallthru
          _
        // Predicated region
        $region37: #{tpu_custom_call.1} parent=11 // pred_check
          %p276 = pneg %p217
        $region38: #{tpu_custom_call.1} parent=11 // pred_check_branch
          %278 = sbr.rel (%p276) target = $region40
        $region39: #{tpu_custom_call.1} parent=11 // pred_region
          _
        $region40: #{tpu_custom_call.1} parent=11 // pred_fallthru
          _
      $region12: #{tpu_custom_call.1} parent=5 // pred_fallthru
        _
      %p279 = scmp.lt.s32.totalorder %s18, 2
      // Predicated region
      $region41: #{tpu_custom_call.1} parent=5 // pred_check
        %p280 = pneg %p279
      $region42: #{tpu_custom_call.1} parent=5 // pred_check_branch
        %282 = sbr.rel (%p280) target = $region44
      $region43: #{tpu_custom_call.1} parent=5 // pred_region
        // Predicated region
        $region45: #{tpu_custom_call.1} parent=43 // pred_check
          %p283 = pneg %p38
        $region46: #{tpu_custom_call.1} parent=43 // pred_check_branch
          %285 = sbr.rel (%p283) target = $region48
        $region47: #{tpu_custom_call.1} parent=43 // pred_region
          %s286 = smul.u32 2, %s18
          %p287 = scmp.lt.s32.totalorder %s286, 3
          %s288 = scalar_select %p287, %s286, 3
          %s289 = smul.addr %s288, 2
          %s290 = smul.addr %s289, 4
          %s291 = scalar_lea.vmem %s0, %s290
          %s292 = smul.u32 2, %s18
        $region48: #{tpu_custom_call.1} parent=43 // pred_fallthru
          _
        // Predicated region
        $region49: #{tpu_custom_call.1} parent=43 // pred_check
          %p293 = pneg %p64
        $region50: #{tpu_custom_call.1} parent=43 // pred_check_branch
          %295 = sbr.rel (%p293) target = $region52
        $region51: #{tpu_custom_call.1} parent=43 // pred_region
          %s296 = smul.u32 2, %s18
          %p297 = scmp.lt.s32.totalorder %s296, 3
          %s298 = scalar_select %p297, %s296, 3
          %s299 = smul.addr %s298, 2
          %s300 = smul.addr %s299, 8
          %s301 = scalar_lea.vmem %s1, %s300
          %s302 = smul.u32 2, %s18
        $region52: #{tpu_custom_call.1} parent=43 // pred_fallthru
          _
      $region44: #{tpu_custom_call.1} parent=5 // pred_fallthru
        _
      %p303 = scmp.le.s32.totalorder 1, %s18
      %p304 = scmp.lt.s32.totalorder %s18, 3
      %p305 = pnand %p303, %p304
      %p306 = pneg %p305
      // Predicated region
      $region53: #{tpu_custom_call.1} parent=5 // pred_check
        _
      $region54: #{tpu_custom_call.1} parent=5 // pred_check_branch
        %308 = sbr.rel (%p305) target = $region56
      $region55: #{tpu_custom_call.1} parent=5 // pred_region
        %s309 = ssub.s32 %s18, 1
        %s310 = smul.u32 2, %s23
        %p311 = scmp.lt.s32.totalorder %s310, 3
        %s312 = scalar_select %p311, %s310, 3
        %s313 = smul.addr %s312, 2
        %s314 = smul.addr %s313, 4
        %s315 = scalar_lea.vmem %s0, %s314
        %p316 = pneg %p44
        %p317 = pneg %p41
        %s318 = smul.u32 2, %s23
        %p319 = scmp.lt.s32.totalorder %s318, 3
        %s320 = scalar_select %p319, %s318, 3
        %s321 = smul.addr %s320, 2
        %s322 = smul.addr %s321, 8
        %s323 = scalar_lea.vmem %s1, %s322
        %p324 = pneg %p70
        %p325 = pneg %p67
        %p326 = pneg %p91
        %p327 = pneg %p88
        %p328 = pneg %p112
        %p329 = pneg %p109
        %p330 = pneg %p133
        %p331 = pneg %p130
        %p332 = pneg %p154
        %p333 = pneg %p151
        %p334 = pneg %p175
        %p335 = pneg %p172
        %p336 = pneg %p196
        %p337 = pneg %p193
        %p338 = pneg %p217
        %p339 = pneg %p214
        %p340 = pneg %p243
        %p341 = pneg %p240
        %s342 = sand.u32 %s230, 1
        %s343 = scalar_lea.sflag [#allocation3], %s342
        %s344 = sand.u32 %s230, 1
        %s345 = smul.addr %s344, 32
        %s346 = scalar_lea.vmem [#allocation2], %s345
        %s347 = smul.u32 2, %s23
        %p348 = scmp.lt.s32.totalorder %s347, 3
        %s349 = scalar_select %p348, %s347, 3
        %s350 = smul.addr %s349, 2
        %s351 = smul.addr %s350, 4
        %s352 = scalar_lea.vmem %s0, %s351
        %s353 = smul.u32 2, %s23
        %s354 = smul.u32 2, %s23
        %p355 = scmp.lt.s32.totalorder %s354, 3
        %s356 = scalar_select %p355, %s354, 3
        %s357 = smul.addr %s356, 2
        %s358 = smul.addr %s357, 8
        %s359 = scalar_lea.vmem %s1, %s358
        %s360 = smul.u32 2, %s23
        %s361 = smul.u32 2, %s23
        %v363 = vld [vmem:[%s352] sm:$0xf]
        %v364 = vld [vmem:[%s352 + $0x4] sm:$0xf]
        %v365 = vld [vmem:[%s352 + $0x8] sm:$0xf]
        %v366 = vld [vmem:[%s352 + $0xc] sm:$0xf]
        %v367 = vld [vmem:[%s359] sm:$0xff]
        %v368 = vld [vmem:[%s359 + $0x8] sm:$0xff]
        %v369 = vld [vmem:[%s359 + $0x10] sm:$0xff]
        %v370 = vld [vmem:[%s359 + $0x18] sm:$0xff]
        %v371 = vld [vmem:[%s2] sm:$0xf]
        %v372 = vld [vmem:[%s3] sm:$0xff]
        %v373 = vld [vmem:[%s3 + $0x8] sm:$0xf]
        %v374 = vld [vmem:[%s3 + $0xc] sm:$0xff]
        %v375 = vld [vmem:[%s3 + $0x14] sm:$0xf]
        %v376 = vld [vmem:[%s3 + $0x18] sm:$0xff]
        %v377 = vld [vmem:[%s3 + $0x20] sm:$0xf]
        %v378 = vld [vmem:[%s3 + $0x24] sm:$0xff]
        %v379 = vld [vmem:[%s3 + $0x2c] sm:$0xf]
        %v380 = vld [vmem:[%s3 + $0x30] sm:$0xff]
        %v381 = vld [vmem:[%s3 + $0x38] sm:$0xf]
        %v382 = vld [vmem:[%s3 + $0x3c] sm:$0xff]
        %v383 = vld [vmem:[%s3 + $0x44] sm:$0xf]
        %v384 = vld [vmem:[%s3 + $0x48] sm:$0xff]
        %v385 = vld [vmem:[%s3 + $0x50] sm:$0xf]
        %v386 = vld [vmem:[%s3 + $0x54] sm:$0xff]
        %v387 = vld [vmem:[%s3 + $0x5c] sm:$0xf]
        %v388 = vld [vmem:[%s3 + $0x60] sm:$0xff]
        %v389 = vld [vmem:[%s3 + $0x68] sm:$0xf]
        %v390 = vld [vmem:[%s3 + $0x6c] sm:$0xff]
        %v391 = vld [vmem:[%s3 + $0x74] sm:$0xf]
        %v392 = vld [vmem:[%s3 + $0x78] sm:$0xff]
        %v393 = vld [vmem:[%s3 + $0x80] sm:$0xf]
        %v394 = vld [vmem:[%s3 + $0x84] sm:$0xff]
        %v395 = vld [vmem:[%s3 + $0x8c] sm:$0xf]
        %v396 = vld [vmem:[%s3 + $0x90] sm:$0xff]
        %v397 = vld [vmem:[%s3 + $0x98] sm:$0xf]
        %v398 = vld [vmem:[%s3 + $0x9c] sm:$0xff]
        %v399 = vld [vmem:[%s3 + $0xa4] sm:$0xf]
        %v400 = vld [vmem:[%s3 + $0xa8] sm:$0xff]
        %v401 = vld [vmem:[%s3 + $0xb0] sm:$0xf]
        %v402 = vld [vmem:[%s3 + $0xb4] sm:$0xff]
        %v403 = vld [vmem:[%s3 + $0xbc] sm:$0xf]
        %v404 = vld [vmem:[%s4] sm:$0x7]
        %v406 = vlaneseq
        %v407 = vshrl.u32 %v406, 7
        %v408 = vsub.s32 0, %v407
        %v409 = vrot.slane %v404, %v408
        %v410 = vlaneseq
        %v411 = vshrl.u32 %v410, 7
        %v412 = vsub.s32 1, %v411
        %v413 = vrot.slane %v404, %v412
        %v414 = vlaneseq
        %v415 = vshrl.u32 %v414, 7
        %v416 = vsub.s32 2, %v415
        %v417 = vrot.slane %v404, %v416
        %v425 = vunpack.c.l.b16 %v363
        %v426 = vunpack.c.l.b16 %v364
        %v427 = vunpack.c.l.b16 %v365
        %v428 = vunpack.c.l.b16 %v366
        %v429 = vpack.c.b16 %v426, %v425
        %v430 = vpack.c.b16 %v428, %v427
        %v465 = vunpack.c.l.b16 %v372
        %v466 = vunpack.c.h.b16 %v372
        %v467 = vunpack.c.l.b16 %v373
        %v468 = vunpack.c.l.b16 %v374
        %v469 = vunpack.c.h.b16 %v374
        %v470 = vunpack.c.l.b16 %v375
        %v471 = vunpack.c.l.b16 %v376
        %v472 = vunpack.c.h.b16 %v376
        %v473 = vunpack.c.l.b16 %v377
        %v474 = vunpack.c.l.b16 %v378
        %v475 = vunpack.c.h.b16 %v378
        %v476 = vunpack.c.l.b16 %v379
        %v477 = vunpack.c.l.b16 %v380
        %v478 = vunpack.c.h.b16 %v380
        %v479 = vunpack.c.l.b16 %v381
        %v480 = vunpack.c.l.b16 %v382
        %v481 = vunpack.c.h.b16 %v382
        %v482 = vunpack.c.l.b16 %v383
        %v483 = vunpack.c.l.b16 %v384
        %v484 = vunpack.c.h.b16 %v384
        %v485 = vunpack.c.l.b16 %v385
        %v486 = vunpack.c.l.b16 %v386
        %v487 = vunpack.c.h.b16 %v386
        %v488 = vunpack.c.l.b16 %v387
        %v489 = vunpack.c.l.b16 %v388
        %v490 = vunpack.c.h.b16 %v388
        %v491 = vunpack.c.l.b16 %v389
        %v492 = vunpack.c.l.b16 %v390
        %v493 = vunpack.c.h.b16 %v390
        %v494 = vunpack.c.l.b16 %v391
        %v495 = vunpack.c.l.b16 %v392
        %v496 = vunpack.c.h.b16 %v392
        %v497 = vunpack.c.l.b16 %v393
        %v498 = vunpack.c.l.b16 %v394
        %v499 = vunpack.c.h.b16 %v394
        %v500 = vunpack.c.l.b16 %v395
        %v501 = vunpack.c.l.b16 %v396
        %v502 = vunpack.c.h.b16 %v396
        %v503 = vunpack.c.l.b16 %v397
        %v504 = vunpack.c.l.b16 %v398
        %v505 = vunpack.c.h.b16 %v398
        %v506 = vunpack.c.l.b16 %v399
        %v507 = vunpack.c.l.b16 %v400
        %v508 = vunpack.c.h.b16 %v400
        %v509 = vunpack.c.l.b16 %v401
        %v510 = vunpack.c.l.b16 %v402
        %v511 = vunpack.c.h.b16 %v402
        %v512 = vunpack.c.l.b16 %v403
        %v513 = vpack.c.b16 %v468, %v465
        %v514 = vpack.c.b16 %v469, %v466
        %v515 = vpack.c.b16 %v470, %v467
        %v516 = vpack.c.b16 %v474, %v471
        %v517 = vpack.c.b16 %v475, %v472
        %v518 = vpack.c.b16 %v476, %v473
        %v519 = vpack.c.b16 %v480, %v477
        %v520 = vpack.c.b16 %v481, %v478
        %v521 = vpack.c.b16 %v482, %v479
        %v522 = vpack.c.b16 %v486, %v483
        %v523 = vpack.c.b16 %v487, %v484
        %v524 = vpack.c.b16 %v488, %v485
        %v525 = vpack.c.b16 %v492, %v489
        %v526 = vpack.c.b16 %v493, %v490
        %v527 = vpack.c.b16 %v494, %v491
        %v528 = vpack.c.b16 %v498, %v495
        %v529 = vpack.c.b16 %v499, %v496
        %v530 = vpack.c.b16 %v500, %v497
        %v531 = vpack.c.b16 %v504, %v501
        %v532 = vpack.c.b16 %v505, %v502
        %v533 = vpack.c.b16 %v506, %v503
        %v534 = vpack.c.b16 %v510, %v507
        %v535 = vpack.c.b16 %v511, %v508
        %v536 = vpack.c.b16 %v512, %v509
        %561 = vmatprep.subr.bf16.mxu0 %v514
        %562 = vmatpush1.bf16.msra.mxu0 %v513
        %563 = vmatprep.subr.bf16.mxu0 %v517
        %564 = vmatpush1.bf16.msra.mxu0 %v516
        %565 = vmatprep.subr.bf16.mxu0 %v520
        %566 = vmatpush1.bf16.msra.mxu0 %v519
        %567 = vmatprep.subr.bf16.mxu0 %v523
        %568 = vmatpush1.bf16.msra.mxu0 %v522
        %569 = vmatprep.subr.bf16.mxu0 %v526
        %570 = vmatpush1.bf16.msra.mxu0 %v525
        %571 = vmatprep.subr.bf16.mxu0 %v529
        %572 = vmatpush1.bf16.msra.mxu0 %v528
        %573 = vmatprep.subr.bf16.mxu0 %v532
        %574 = vmatpush1.bf16.msra.mxu0 %v531
        %575 = vmatprep.subr.bf16.mxu0 %v535
        %576 = vmatpush1.bf16.msra.mxu0 %v534
        %577 = vmatprep.subr.bf16.mxu0 0
        %578 = vmatpush1.bf16.msra.mxu0 0
        %579 = vmatprep.subr.bf16.mxu0 0
        %580 = vmatpush1.bf16.msra.mxu0 0
        %581 = vmatprep.subr.bf16.mxu0 0
        %582 = vmatpush1.bf16.msra.mxu0 0
        %583 = vmatprep.subr.bf16.mxu0 0
        %584 = vmatpush1.bf16.msra.mxu0 0
        %585 = vmatprep.subr.bf16.mxu0 0
        %586 = vmatpush1.bf16.msra.mxu0 0
        %587 = vmatprep.subr.bf16.mxu0 0
        %588 = vmatpush1.bf16.msra.mxu0 0
        %589 = vmatprep.subr.bf16.mxu0 0
        %590 = vmatpush1.bf16.msra.mxu0 0
        %591 = vmatprep.subr.bf16.mxu0 0
        %592 = vmatpush1.bf16.msra.mxu0 0
        %593 = vmatprep.mubr.bf16.mxu0 0
        %594 = vmatmul.mubr.bf16.gmra.mrb[0].mxu0 %v429
        %v595 = vpop.f32.mrb[0].mxu0
        %v596 = vadd.f32 %v409, %v595
        %v597 = vpop.f32.mrb[0].mxu0
        %v598 = vadd.f32 %v413, %v597
        %v599 = vpop.f32.mrb[0].mxu0
        %v600 = vadd.f32 %v409, %v599
        %v601 = vpop.f32.mrb[0].mxu0
        %v602 = vadd.f32 %v413, %v601
        %603 = vmatprep.mubr.bf16.mxu0 0
        %604 = vmatmul.mubr.bf16.gmra.mrb[0].mxu0 %v430
        %v605 = vpop.f32.mrb[0].mxu0
        %v606 = vadd.f32 %v409, %v605
        %v607 = vpop.f32.mrb[0].mxu0
        %v608 = vadd.f32 %v413, %v607
        %v609 = vpop.f32.mrb[0].mxu0
        %v610 = vadd.f32 %v409, %v609
        %v611 = vpop.f32.mrb[0].mxu0
        %v612 = vadd.f32 %v413, %v611
        %613 = vdwg.mxu0
        %614 = vmatprep.subr.bf16.mxu0 0
        %615 = vmatpush1.bf16.msra.mxu0 %v515
        %616 = vmatprep.subr.bf16.mxu0 0
        %617 = vmatpush1.bf16.msra.mxu0 %v518
        %618 = vmatprep.subr.bf16.mxu0 0
        %619 = vmatpush1.bf16.msra.mxu0 %v521
        %620 = vmatprep.subr.bf16.mxu0 0
        %621 = vmatpush1.bf16.msra.mxu0 %v524
        %622 = vmatprep.subr.bf16.mxu0 0
        %623 = vmatpush1.bf16.msra.mxu0 %v527
        %624 = vmatprep.subr.bf16.mxu0 0
        %625 = vmatpush1.bf16.msra.mxu0 %v530
        %626 = vmatprep.subr.bf16.mxu0 0
        %627 = vmatpush1.bf16.msra.mxu0 %v533
        %628 = vmatprep.subr.bf16.mxu0 0
        %629 = vmatpush1.bf16.msra.mxu0 %v536
        %630 = vmatprep.subr.bf16.mxu0 0
        %631 = vmatpush1.bf16.msra.mxu0 0
        %632 = vmatprep.subr.bf16.mxu0 0
        %633 = vmatpush1.bf16.msra.mxu0 0
        %634 = vmatprep.subr.bf16.mxu0 0
        %635 = vmatpush1.bf16.msra.mxu0 0
        %636 = vmatprep.subr.bf16.mxu0 0
        %637 = vmatpush1.bf16.msra.mxu0 0
        %638 = vmatprep.subr.bf16.mxu0 0
        %639 = vmatpush1.bf16.msra.mxu0 0
        %640 = vmatprep.subr.bf16.mxu0 0
        %641 = vmatpush1.bf16.msra.mxu0 0
        %642 = vmatprep.subr.bf16.mxu0 0
        %643 = vmatpush1.bf16.msra.mxu0 0
        %644 = vmatprep.subr.bf16.mxu0 0
        %645 = vmatpush1.bf16.msra.mxu0 0
        %646 = vmatprep.mubr.bf16.mxu0 0
        %647 = vmatmul.mubr.bf16.gmra.mrb[0].mxu0 %v429
        %v648 = vpop.f32.mrb[0].mxu0
        %v649 = vadd.f32 %v417, %v648
        %v650 = vpop.f32.mrb[0].mxu0
        %v651 = vpop.f32.mrb[0].mxu0
        %v652 = vadd.f32 %v417, %v651
        %v653 = vpop.f32.mrb[0].mxu0
        %654 = vmatprep.mubr.bf16.mxu0 0
        %655 = vmatmul.mubr.bf16.gmra.mrb[0].mxu0 %v430
        %v656 = vpop.f32.mrb[0].mxu0
        %v657 = vadd.f32 %v417, %v656
        %v658 = vpop.f32.mrb[0].mxu0
        %v659 = vpop.f32.mrb[0].mxu0
        %v660 = vadd.f32 %v417, %v659
        %v661 = vpop.f32.mrb[0].mxu0
        %662 = vdwg.mxu0
        %v663 = vmul.f32 %v649, 0.25
        %v664 = vmul.f32 %v652, 0.25
        %v665 = vmul.f32 %v657, 0.25
        %v666 = vmul.f32 %v660, 0.25
        %668 = vset.pattern.permute.xlu0 0
        %669 = vperm.xlu0 %668, %v367
        %v670 = vpop.permute.xlu0 %669
        %673 = vset.pattern.permute.xlu0 0
        %674 = vperm.xlu0 %673, %v368
        %v675 = vpop.permute.xlu0 %674
        %678 = vset.pattern.permute.xlu0 0
        %679 = vperm.xlu0 %678, %v369
        %v680 = vpop.permute.xlu0 %679
        %683 = vset.pattern.permute.xlu0 0
        %684 = vperm.xlu0 %683, %v370
        %v685 = vpop.permute.xlu0 %684
        %v687 = vadd.f32 %v663, %v670
        %v688 = vadd.f32 %v664, %v675
        %v689 = vadd.f32 %v665, %v680
        %v690 = vadd.f32 %v666, %v685
        %vm691 = vcmask 64512
        %v692 = vsel %vm691, %v687, -inf
        %v693 = vsel %vm691, %v688, -inf
        %v694 = vmax.f32 %v692, %v693
        %v695 = vrot.slane %v694, 4
        %v696 = vmax.f32 %v694, %v695
        %v697 = vrot.slane %v696, 2
        %v698 = vmax.f32 %v696, %v697
        %v699 = vrot.slane %v698, 1
        %v700 = vmax.f32 %v698, %v699
        %v701 = vsel %vm691, %v689, -inf
        %v702 = vsel %vm691, %v690, -inf
        %v703 = vmax.f32 %v701, %v702
        %v704 = vrot.slane %v703, 4
        %v705 = vmax.f32 %v703, %v704
        %v706 = vrot.slane %v705, 2
        %v707 = vmax.f32 %v705, %v706
        %v708 = vrot.slane %v707, 1
        %v709 = vmax.f32 %v707, %v708
        %v710 = vsub.f32 %v687, %v700
        %v711 = vsub.f32 %v688, %v700
        %v712 = vsub.f32 %v689, %v709
        %v713 = vsub.f32 %v690, %v709
        %v714 = vmul.f32 %v710, 1.442695
        %v715 = vpow.pop %v714
        %v716 = vmul.f32 %v711, 1.442695
        %v717 = vpow.pop %v716
        %v718 = vmul.f32 %v712, 1.442695
        %v719 = vpow.pop %v718
        %v720 = vmul.f32 %v713, 1.442695
        %v721 = vpow.pop %v720
        %v722 = vsel %vm691, %v715, 0.0
        %v723 = vsel %vm691, %v717, 0.0
        %v724 = vadd.f32 %v722, %v723
        %v725 = vrot.slane %v724, 4
        %v726 = vadd.f32 %v724, %v725
        %v727 = vrot.slane %v726, 2
        %v728 = vadd.f32 %v726, %v727
        %v729 = vrot.slane %v728, 1
        %v730 = vadd.f32 %v728, %v729
        %v731 = vsel %vm691, %v719, 0.0
        %v732 = vsel %vm691, %v721, 0.0
        %v733 = vadd.f32 %v731, %v732
        %v734 = vrot.slane %v733, 4
        %v735 = vadd.f32 %v733, %v734
        %v736 = vrot.slane %v735, 2
        %v737 = vadd.f32 %v735, %v736
        %v738 = vrot.slane %v737, 1
        %v739 = vadd.f32 %v737, %v738
        %v740 = vrcp.pop %v730
        %v741 = vrcp.pop %v739
        %v742 = vmul.f32 %v715, %v740
        %v743 = vmul.f32 %v717, %v740
        %v744 = vmul.f32 %v719, %v741
        %v745 = vmul.f32 %v721, %v741
        %v746 = vpack.c.bf16 %v743, %v742
        %v747 = vpack.c.bf16 %v745, %v744
        %v749 = vsel %vm691, %v746, 0
        %v752 = vsel %vm691, %v747, 0
        %vm754 = vcmask 1043456
        %v756 = vsel %vm754, %v371, 0
        %758 = vmatprep.subr.bf16.mxu0 0
        %759 = vmatpush1.bf16.msra.mxu0 %v756
        %760 = vmatprep.subr.bf16.mxu0 0
        %761 = vmatpush1.bf16.msra.mxu0 0
        %762 = vmatprep.subr.bf16.mxu0 0
        %763 = vmatpush1.bf16.msra.mxu0 0
        %764 = vmatprep.subr.bf16.mxu0 0
        %765 = vmatpush1.bf16.msra.mxu0 0
        %766 = vmatprep.subr.bf16.mxu0 0
        %767 = vmatpush1.bf16.msra.mxu0 0
        %768 = vmatprep.subr.bf16.mxu0 0
        %769 = vmatpush1.bf16.msra.mxu0 0
        %770 = vmatprep.subr.bf16.mxu0 0
        %771 = vmatpush1.bf16.msra.mxu0 0
        %772 = vmatprep.subr.bf16.mxu0 0
        %773 = vmatpush1.bf16.msra.mxu0 0
        %774 = vmatprep.subr.bf16.mxu0 0
        %775 = vmatpush1.bf16.msra.mxu0 0
        %776 = vmatprep.subr.bf16.mxu0 0
        %777 = vmatpush1.bf16.msra.mxu0 0
        %778 = vmatprep.subr.bf16.mxu0 0
        %779 = vmatpush1.bf16.msra.mxu0 0
        %780 = vmatprep.subr.bf16.mxu0 0
        %781 = vmatpush1.bf16.msra.mxu0 0
        %782 = vmatprep.subr.bf16.mxu0 0
        %783 = vmatpush1.bf16.msra.mxu0 0
        %784 = vmatprep.subr.bf16.mxu0 0
        %785 = vmatpush1.bf16.msra.mxu0 0
        %786 = vmatprep.subr.bf16.mxu0 0
        %787 = vmatpush1.bf16.msra.mxu0 0
        %788 = vmatprep.subr.bf16.mxu0 0
        %789 = vmatpush1.bf16.msra.mxu0 0
        %790 = vmatprep.mubr.bf16.mxu0 0
        %791 = vmatmul.mubr.bf16.gmra.mrb[0].mxu0 %v749
        %v792 = vpop.f32.mrb[0].mxu0
        %v793 = vadd.f32 0.0, %v792
        %v794 = vpop.f32.mrb[0].mxu0
        %v795 = vpop.f32.mrb[0].mxu0
        %v796 = vadd.f32 0.0, %v795
        %v797 = vpop.f32.mrb[0].mxu0
        %798 = vmatprep.mubr.bf16.mxu0 0
        %799 = vmatmul.mubr.bf16.gmra.mrb[0].mxu0 %v752
        %v800 = vpop.f32.mrb[0].mxu0
        %v801 = vadd.f32 0.0, %v800
        %v802 = vpop.f32.mrb[0].mxu0
        %v803 = vpop.f32.mrb[0].mxu0
        %v804 = vadd.f32 0.0, %v803
        %v805 = vpop.f32.mrb[0].mxu0
        %806 = vdwg.mxu0
        %v807 = vmul.f32 %v793, %v596
        %v808 = vmul.f32 %v796, %v600
        %v809 = vmul.f32 %v801, %v606
        %v810 = vmul.f32 %v804, %v610
        %v811 = vadd.f32 %v807, %v808
        %v812 = vrot.slane %v811, 4
        %v813 = vadd.f32 %v811, %v812
        %v814 = vrot.slane %v813, 2
        %v815 = vadd.f32 %v813, %v814
        %v816 = vrot.slane %v815, 1
        %v817 = vadd.f32 %v815, %v816
        %v818 = vadd.f32 %v809, %v810
        %v819 = vrot.slane %v818, 4
        %v820 = vadd.f32 %v818, %v819
        %v821 = vrot.slane %v820, 2
        %v822 = vadd.f32 %v820, %v821
        %v823 = vrot.slane %v822, 1
        %v824 = vadd.f32 %v822, %v823
        %v825 = vmul.f32 %v598, %v817
        %v826 = vmul.f32 %v602, %v817
        %v827 = vmul.f32 %v608, %v824
        %v828 = vmul.f32 %v612, %v824
        %v829 = vpack.c.bf16 %v826, %v825
        %v830 = vpack.c.bf16 %v828, %v827
        %v831 = vld [vmem:[%s5] sm:$0xf]
        %v832 = vld [vmem:[%s5 + $0x4] sm:$0xf]
        %v833 = vld [vmem:[%s5 + $0x8] sm:$0xf]
        %v834 = vld [vmem:[%s5 + $0xc] sm:$0xf]
        %v835 = vld [vmem:[%s5 + $0x10] sm:$0xf]
        %v836 = vld [vmem:[%s5 + $0x14] sm:$0xf]
        %v837 = vld [vmem:[%s5 + $0x18] sm:$0xf]
        %v838 = vld [vmem:[%s5 + $0x1c] sm:$0xf]
        %v839 = vld [vmem:[%s5 + $0x20] sm:$0xf]
        %v840 = vld [vmem:[%s5 + $0x24] sm:$0xf]
        %v841 = vld [vmem:[%s5 + $0x28] sm:$0xf]
        %v842 = vld [vmem:[%s5 + $0x2c] sm:$0xf]
        %v843 = vld [vmem:[%s5 + $0x30] sm:$0xf]
        %v844 = vld [vmem:[%s5 + $0x34] sm:$0xf]
        %v845 = vld [vmem:[%s5 + $0x38] sm:$0xf]
        %v846 = vld [vmem:[%s5 + $0x3c] sm:$0xf]
        %v847 = vld [vmem:[%s6] sm:$0x1]
        %v849 = vlaneseq
        %v850 = vshrl.u32 %v849, 7
        %v851 = vsub.s32 0, %v850
        %v852 = vrot.slane %v847, %v851
        %v870 = vunpack.c.l.b16 %v831
        %v871 = vunpack.c.l.b16 %v832
        %v872 = vunpack.c.l.b16 %v833
        %v873 = vunpack.c.l.b16 %v834
        %v874 = vunpack.c.l.b16 %v835
        %v875 = vunpack.c.l.b16 %v836
        %v876 = vunpack.c.l.b16 %v837
        %v877 = vunpack.c.l.b16 %v838
        %v878 = vunpack.c.l.b16 %v839
        %v879 = vunpack.c.l.b16 %v840
        %v880 = vunpack.c.l.b16 %v841
        %v881 = vunpack.c.l.b16 %v842
        %v882 = vunpack.c.l.b16 %v843
        %v883 = vunpack.c.l.b16 %v844
        %v884 = vunpack.c.l.b16 %v845
        %v885 = vunpack.c.l.b16 %v846
        %v886 = vpack.c.b16 %v871, %v870
        %v887 = vpack.c.b16 %v873, %v872
        %v888 = vpack.c.b16 %v875, %v874
        %v889 = vpack.c.b16 %v877, %v876
        %v890 = vpack.c.b16 %v879, %v878
        %v891 = vpack.c.b16 %v881, %v880
        %v892 = vpack.c.b16 %v883, %v882
        %v893 = vpack.c.b16 %v885, %v884
        %902 = vmatprep.subr.bf16.mxu0 0
        %903 = vmatpush1.bf16.msra.mxu0 %v886
        %904 = vmatprep.subr.bf16.mxu0 0
        %905 = vmatpush1.bf16.msra.mxu0 %v887
        %906 = vmatprep.subr.bf16.mxu0 0
        %907 = vmatpush1.bf16.msra.mxu0 %v888
        %908 = vmatprep.subr.bf16.mxu0 0
        %909 = vmatpush1.bf16.msra.mxu0 %v889
        %910 = vmatprep.subr.bf16.mxu0 0
        %911 = vmatpush1.bf16.msra.mxu0 %v890
        %912 = vmatprep.subr.bf16.mxu0 0
        %913 = vmatpush1.bf16.msra.mxu0 %v891
        %914 = vmatprep.subr.bf16.mxu0 0
        %915 = vmatpush1.bf16.msra.mxu0 %v892
        %916 = vmatprep.subr.bf16.mxu0 0
        %917 = vmatpush1.bf16.msra.mxu0 %v893
        %918 = vmatprep.subr.bf16.mxu0 0
        %919 = vmatpush1.bf16.msra.mxu0 0
        %920 = vmatprep.subr.bf16.mxu0 0
        %921 = vmatpush1.bf16.msra.mxu0 0
        %922 = vmatprep.subr.bf16.mxu0 0
        %923 = vmatpush1.bf16.msra.mxu0 0
        %924 = vmatprep.subr.bf16.mxu0 0
        %925 = vmatpush1.bf16.msra.mxu0 0
        %926 = vmatprep.subr.bf16.mxu0 0
        %927 = vmatpush1.bf16.msra.mxu0 0
        %928 = vmatprep.subr.bf16.mxu0 0
        %929 = vmatpush1.bf16.msra.mxu0 0
        %930 = vmatprep.subr.bf16.mxu0 0
        %931 = vmatpush1.bf16.msra.mxu0 0
        %932 = vmatprep.subr.bf16.mxu0 0
        %933 = vmatpush1.bf16.msra.mxu0 0
        %934 = vmatprep.mubr.bf16.mxu0 0
        %935 = vmatmul.mubr.bf16.gmra.mrb[0].mxu0 %v829
        %v936 = vpop.f32.mrb[0].mxu0
        %v937 = vadd.f32 %v852, %v936
        %v938 = vpop.f32.mrb[0].mxu0
        %v939 = vpop.f32.mrb[0].mxu0
        %v940 = vadd.f32 %v852, %v939
        %v941 = vpop.f32.mrb[0].mxu0
        %942 = vmatprep.mubr.bf16.mxu0 0
        %943 = vmatmul.mubr.bf16.gmra.mrb[0].mxu0 %v830
        %v944 = vpop.f32.mrb[0].mxu0
        %v945 = vadd.f32 %v852, %v944
        %v946 = vpop.f32.mrb[0].mxu0
        %v947 = vpop.f32.mrb[0].mxu0
        %v948 = vadd.f32 %v852, %v947
        %v949 = vpop.f32.mrb[0].mxu0
        %950 = vdwg.mxu0
        %v951 = vmul.f32 %v937, 0.25
        %v952 = vmul.f32 %v940, 0.25
        %v953 = vmul.f32 %v945, 0.25
        %v954 = vmul.f32 %v948, 0.25
        %v955 = vadd.f32 %v951, %v670
        %v956 = vadd.f32 %v952, %v675
        %v957 = vadd.f32 %v953, %v680
        %v958 = vadd.f32 %v954, %v685
        %v959 = vsel %vm691, %v955, -inf
        %v960 = vsel %vm691, %v956, -inf
        %v961 = vmax.f32 %v959, %v960
        %v962 = vrot.slane %v961, 4
        %v963 = vmax.f32 %v961, %v962
        %v964 = vrot.slane %v963, 2
        %v965 = vmax.f32 %v963, %v964
        %v966 = vrot.slane %v965, 1
        %v967 = vmax.f32 %v965, %v966
        %v968 = vsel %vm691, %v957, -inf
        %v969 = vsel %vm691, %v958, -inf
        %v970 = vmax.f32 %v968, %v969
        %v971 = vrot.slane %v970, 4
        %v972 = vmax.f32 %v970, %v971
        %v973 = vrot.slane %v972, 2
        %v974 = vmax.f32 %v972, %v973
        %v975 = vrot.slane %v974, 1
        %v976 = vmax.f32 %v974, %v975
        %v977 = vsub.f32 %v955, %v967
        %v978 = vsub.f32 %v956, %v967
        %v979 = vsub.f32 %v957, %v976
        %v980 = vsub.f32 %v958, %v976
        %v981 = vmul.f32 %v977, 1.442695
        %v982 = vpow.pop %v981
        %v983 = vmul.f32 %v978, 1.442695
        %v984 = vpow.pop %v983
        %v985 = vmul.f32 %v979, 1.442695
        %v986 = vpow.pop %v985
        %v987 = vmul.f32 %v980, 1.442695
        %v988 = vpow.pop %v987
        %v989 = vsel %vm691, %v982, 0.0
        %v990 = vsel %vm691, %v984, 0.0
        %v991 = vadd.f32 %v989, %v990
        %v992 = vrot.slane %v991, 4
        %v993 = vadd.f32 %v991, %v992
        %v994 = vrot.slane %v993, 2
        %v995 = vadd.f32 %v993, %v994
        %v996 = vrot.slane %v995, 1
        %v997 = vadd.f32 %v995, %v996
        %v998 = vsel %vm691, %v986, 0.0
        %v999 = vsel %vm691, %v988, 0.0
        %v1000 = vadd.f32 %v998, %v999
        %v1001 = vrot.slane %v1000, 4
        %v1002 = vadd.f32 %v1000, %v1001
        %v1003 = vrot.slane %v1002, 2
        %v1004 = vadd.f32 %v1002, %v1003
        %v1005 = vrot.slane %v1004, 1
        %v1006 = vadd.f32 %v1004, %v1005
        %v1007 = vrcp.pop %v997
        %v1008 = vrcp.pop %v1006
        %v1009 = vmul.f32 %v982, %v1007
        %v1010 = vmul.f32 %v984, %v1007
        %v1011 = vmul.f32 %v986, %v1008
        %v1012 = vmul.f32 %v988, %v1008
        %v1013 = vpack.c.bf16 %v1010, %v1009
        %v1014 = vpack.c.bf16 %v1012, %v1011
        %v1016 = vsel %vm691, %v1013, 0
        %v1019 = vsel %vm691, %v1014, 0
        %1021 = vmatprep.subr.bf16.mxu0 0
        %1022 = vmatpush1.bf16.msra.mxu0 %v756
        %1023 = vmatprep.subr.bf16.mxu0 0
        %1024 = vmatpush1.bf16.msra.mxu0 0
        %1025 = vmatprep.subr.bf16.mxu0 0
        %1026 = vmatpush1.bf16.msra.mxu0 0
        %1027 = vmatprep.subr.bf16.mxu0 0
        %1028 = vmatpush1.bf16.msra.mxu0 0
        %1029 = vmatprep.subr.bf16.mxu0 0
        %1030 = vmatpush1.bf16.msra.mxu0 0
        %1031 = vmatprep.subr.bf16.mxu0 0
        %1032 = vmatpush1.bf16.msra.mxu0 0
        %1033 = vmatprep.subr.bf16.mxu0 0
        %1034 = vmatpush1.bf16.msra.mxu0 0
        %1035 = vmatprep.subr.bf16.mxu0 0
        %1036 = vmatpush1.bf16.msra.mxu0 0
        %1037 = vmatprep.subr.bf16.mxu0 0
        %1038 = vmatpush1.bf16.msra.mxu0 0
        %1039 = vmatprep.subr.bf16.mxu0 0
        %1040 = vmatpush1.bf16.msra.mxu0 0
        %1041 = vmatprep.subr.bf16.mxu0 0
        %1042 = vmatpush1.bf16.msra.mxu0 0
        %1043 = vmatprep.subr.bf16.mxu0 0
        %1044 = vmatpush1.bf16.msra.mxu0 0
        %1045 = vmatprep.subr.bf16.mxu0 0
        %1046 = vmatpush1.bf16.msra.mxu0 0
        %1047 = vmatprep.subr.bf16.mxu0 0
        %1048 = vmatpush1.bf16.msra.mxu0 0
        %1049 = vmatprep.subr.bf16.mxu0 0
        %1050 = vmatpush1.bf16.msra.mxu0 0
        %1051 = vmatprep.subr.bf16.mxu0 0
        %1052 = vmatpush1.bf16.msra.mxu0 0
        %1053 = vmatprep.mubr.bf16.mxu0 0
        %1054 = vmatmul.mubr.bf16.gmra.mrb[0].mxu0 %v1016
        %v1055 = vpop.f32.mrb[0].mxu0
        %v1056 = vadd.f32 0.0, %v1055
        %v1057 = vpop.f32.mrb[0].mxu0
        %v1058 = vpop.f32.mrb[0].mxu0
        %v1059 = vadd.f32 0.0, %v1058
        %v1060 = vpop.f32.mrb[0].mxu0
        %1061 = vmatprep.mubr.bf16.mxu0 0
        %1062 = vmatmul.mubr.bf16.gmra.mrb[0].mxu0 %v1019
        %v1063 = vpop.f32.mrb[0].mxu0
        %v1064 = vadd.f32 0.0, %v1063
        %v1065 = vpop.f32.mrb[0].mxu0
        %v1066 = vpop.f32.mrb[0].mxu0
        %v1067 = vadd.f32 0.0, %v1066
        %v1068 = vpop.f32.mrb[0].mxu0
        %1069 = vdwg.mxu0
        %v1070 = vmul.f32 %v1056, %v825
        %v1071 = vmul.f32 %v1059, %v826
        %v1072 = vmul.f32 %v1064, %v827
        %v1073 = vmul.f32 %v1067, %v828
        %v1074 = vadd.f32 %v1070, %v1071
        %v1075 = vrot.slane %v1074, 4
        %v1076 = vadd.f32 %v1074, %v1075
        %v1077 = vrot.slane %v1076, 2
        %v1078 = vadd.f32 %v1076, %v1077
        %v1079 = vrot.slane %v1078, 1
        %v1080 = vadd.f32 %v1078, %v1079
        %v1081 = vadd.f32 %v1072, %v1073
        %v1082 = vrot.slane %v1081, 4
        %v1083 = vadd.f32 %v1081, %v1082
        %v1084 = vrot.slane %v1083, 2
        %v1085 = vadd.f32 %v1083, %v1084
        %v1086 = vrot.slane %v1085, 1
        %v1087 = vadd.f32 %v1085, %v1086
        %v1088 = vmul.f32 %v1080, %v596
        %v1089 = vmul.f32 %v1080, %v600
        %v1090 = vmul.f32 %v1087, %v606
        %v1091 = vmul.f32 %v1087, %v610
        %v1092 = vpack.c.bf16 %v1089, %v1088
        %v1093 = vpack.c.bf16 %v1091, %v1090
        %v1094 = vld [vmem:[%s7] sm:$0xf]
        %v1095 = vld [vmem:[%s7 + $0x4] sm:$0xf]
        %v1096 = vld [vmem:[%s7 + $0x8] sm:$0xf]
        %v1097 = vld [vmem:[%s7 + $0xc] sm:$0xf]
        %v1098 = vld [vmem:[%s7 + $0x10] sm:$0xf]
        %v1099 = vld [vmem:[%s7 + $0x14] sm:$0xf]
        %v1100 = vld [vmem:[%s7 + $0x18] sm:$0xf]
        %v1101 = vld [vmem:[%s7 + $0x1c] sm:$0xf]
        %v1102 = vld [vmem:[%s7 + $0x20] sm:$0xf]
        %v1103 = vld [vmem:[%s7 + $0x24] sm:$0xf]
        %v1104 = vld [vmem:[%s7 + $0x28] sm:$0xf]
        %v1105 = vld [vmem:[%s7 + $0x2c] sm:$0xf]
        %v1106 = vld [vmem:[%s7 + $0x30] sm:$0xf]
        %v1107 = vld [vmem:[%s7 + $0x34] sm:$0xf]
        %v1108 = vld [vmem:[%s7 + $0x38] sm:$0xf]
        %v1109 = vld [vmem:[%s7 + $0x3c] sm:$0xf]
        %v1110 = vld [vmem:[%s8] sm:$0x1]
        %v1112 = vlaneseq
        %v1113 = vshrl.u32 %v1112, 7
        %v1114 = vsub.s32 0, %v1113
        %v1115 = vrot.slane %v1110, %v1114
        %v1133 = vunpack.c.l.b16 %v1094
        %v1134 = vunpack.c.l.b16 %v1095
        %v1135 = vunpack.c.l.b16 %v1096
        %v1136 = vunpack.c.l.b16 %v1097
        %v1137 = vunpack.c.l.b16 %v1098
        %v1138 = vunpack.c.l.b16 %v1099
        %v1139 = vunpack.c.l.b16 %v1100
        %v1140 = vunpack.c.l.b16 %v1101
        %v1141 = vunpack.c.l.b16 %v1102
        %v1142 = vunpack.c.l.b16 %v1103
        %v1143 = vunpack.c.l.b16 %v1104
        %v1144 = vunpack.c.l.b16 %v1105
        %v1145 = vunpack.c.l.b16 %v1106
        %v1146 = vunpack.c.l.b16 %v1107
        %v1147 = vunpack.c.l.b16 %v1108
        %v1148 = vunpack.c.l.b16 %v1109
        %v1149 = vpack.c.b16 %v1134, %v1133
        %v1150 = vpack.c.b16 %v1136, %v1135
        %v1151 = vpack.c.b16 %v1138, %v1137
        %v1152 = vpack.c.b16 %v1140, %v1139
        %v1153 = vpack.c.b16 %v1142, %v1141
        %v1154 = vpack.c.b16 %v1144, %v1143
        %v1155 = vpack.c.b16 %v1146, %v1145
        %v1156 = vpack.c.b16 %v1148, %v1147
        %1165 = vmatprep.subr.bf16.mxu0 0
        %1166 = vmatpush1.bf16.msra.mxu0 %v1149
        %1167 = vmatprep.subr.bf16.mxu0 0
        %1168 = vmatpush1.bf16.msra.mxu0 %v1150
        %1169 = vmatprep.subr.bf16.mxu0 0
        %1170 = vmatpush1.bf16.msra.mxu0 %v1151
        %1171 = vmatprep.subr.bf16.mxu0 0
        %1172 = vmatpush1.bf16.msra.mxu0 %v1152
        %1173 = vmatprep.subr.bf16.mxu0 0
        %1174 = vmatpush1.bf16.msra.mxu0 %v1153
        %1175 = vmatprep.subr.bf16.mxu0 0
        %1176 = vmatpush1.bf16.msra.mxu0 %v1154
        %1177 = vmatprep.subr.bf16.mxu0 0
        %1178 = vmatpush1.bf16.msra.mxu0 %v1155
        %1179 = vmatprep.subr.bf16.mxu0 0
        %1180 = vmatpush1.bf16.msra.mxu0 %v1156
        %1181 = vmatprep.subr.bf16.mxu0 0
        %1182 = vmatpush1.bf16.msra.mxu0 0
        %1183 = vmatprep.subr.bf16.mxu0 0
        %1184 = vmatpush1.bf16.msra.mxu0 0
        %1185 = vmatprep.subr.bf16.mxu0 0
        %1186 = vmatpush1.bf16.msra.mxu0 0
        %1187 = vmatprep.subr.bf16.mxu0 0
        %1188 = vmatpush1.bf16.msra.mxu0 0
        %1189 = vmatprep.subr.bf16.mxu0 0
        %1190 = vmatpush1.bf16.msra.mxu0 0
        %1191 = vmatprep.subr.bf16.mxu0 0
        %1192 = vmatpush1.bf16.msra.mxu0 0
        %1193 = vmatprep.subr.bf16.mxu0 0
        %1194 = vmatpush1.bf16.msra.mxu0 0
        %1195 = vmatprep.subr.bf16.mxu0 0
        %1196 = vmatpush1.bf16.msra.mxu0 0
        %1197 = vmatprep.mubr.bf16.mxu0 0
        %1198 = vmatmul.mubr.bf16.gmra.mrb[0].mxu0 %v1092
        %v1199 = vpop.f32.mrb[0].mxu0
        %v1200 = vadd.f32 %v1115, %v1199
        %v1201 = vpop.f32.mrb[0].mxu0
        %v1202 = vpop.f32.mrb[0].mxu0
        %v1203 = vadd.f32 %v1115, %v1202
        %v1204 = vpop.f32.mrb[0].mxu0
        %1205 = vmatprep.mubr.bf16.mxu0 0
        %1206 = vmatmul.mubr.bf16.gmra.mrb[0].mxu0 %v1093
        %v1207 = vpop.f32.mrb[0].mxu0
        %v1208 = vadd.f32 %v1115, %v1207
        %v1209 = vpop.f32.mrb[0].mxu0
        %v1210 = vpop.f32.mrb[0].mxu0
        %v1211 = vadd.f32 %v1115, %v1210
        %v1212 = vpop.f32.mrb[0].mxu0
        %1213 = vdwg.mxu0
        %v1214 = vadd.f32 %v1200, %v596
        %v1215 = vadd.f32 %v1203, %v600
        %v1216 = vadd.f32 %v1208, %v606
        %v1217 = vadd.f32 %v1211, %v610
        %1218 = vst [vmem:[%s346] sm:$0xff] %v1214
        %1219 = vst [vmem:[%s346 + $0x8] sm:$0xff] %v1215
        %1220 = vst [vmem:[%s346 + $0x10] sm:$0xff] %v1216
        %1221 = vst [vmem:[%s346 + $0x18] sm:$0xff] %v1217
        %s1222 = sand.u32 %s230, 1
        %s1223 = scalar_lea.sflag [#allocation3], %s1222
        %s1224 = sand.u32 %s230, 1
        %s1225 = smul.addr %s1224, 32
        %s1226 = scalar_lea.vmem [#allocation2], %s1225
        // Predicated region
        $region57: #{tpu_custom_call.1} parent=55 // pred_check
          %p1227 = pneg %p240
        $region58: #{tpu_custom_call.1} parent=55 // pred_check_branch
          %1229 = sbr.rel (%p1227) target = $region60
        $region59: #{tpu_custom_call.1} parent=55 // pred_region
          %s1230 = smul.u32 2, %s23
          %s1232 = ssub.s32 512, 512
          %1233 = vsyncadd %s1223, %s1232
          %s1234 = smul.addr %s1230, 2
          %s1235 = smul.addr %s1234, 128
          %s1236 = scalar_lea.hbm %s9, %s1235
          %s1237 = sshll.u32 %s1226, 4
          %s1238 = int_to_ptr.vmem [resolvable:$true] %s1237
          %1243 = dma.vmem_to_hbm [thread:$0]  %s1238, 512, %s1236, %s1223, 128, 128, 8
        $region60: #{tpu_custom_call.1} parent=55 // pred_fallthru
          _
      $region56: #{tpu_custom_call.1} parent=5 // pred_fallthru
        _
      %p1244 = scmp.le.s32.totalorder 2, %s18
      // Predicated region
      $region61: #{tpu_custom_call.1} parent=5 // pred_check
        %p1245 = pneg %p1244
      $region62: #{tpu_custom_call.1} parent=5 // pred_check_branch
        %1247 = sbr.rel (%p1245) target = $region64
      $region63: #{tpu_custom_call.1} parent=5 // pred_region
        %s1248 = ssub.s32 %s18, 2
        // Predicated region
        $region65: #{tpu_custom_call.1} parent=63 // pred_check
          %p1249 = pneg %p246
        $region66: #{tpu_custom_call.1} parent=63 // pred_check_branch
          %1251 = sbr.rel (%p1249) target = $region68
        $region67: #{tpu_custom_call.1} parent=63 // pred_region
          %s1252 = sand.u32 %s231, 1
          %s1253 = scalar_lea.sflag [#allocation3], %s1252
          %s1254 = sand.u32 %s231, 1
          %s1255 = smul.addr %s1254, 32
          %s1256 = scalar_lea.vmem [#allocation2], %s1255
          %1257 = dma.done %s1253, 512
        $region68: #{tpu_custom_call.1} parent=63 // pred_fallthru
          _
      $region64: #{tpu_custom_call.1} parent=5 // pred_fallthru
        _
    $region6: #{tpu_custom_call.1} parent=1 // loop_footer
      %s22 = sadd.s32 1, %s18
    $region7: #{tpu_custom_call.1} parent=1 // loop_footer_branch
      %17 = sbr.rel target = $region3
    $region8: #{tpu_custom_call.1} parent=1 // loop_exit
      _
    %1258 = vsyncpa [#allocation3], 1
    %s1259 = scalar_lea.sflag [#allocation3], 1
    %1260 = vsyncpa %s1259, 1

</llo_original>
